<compile_context>
chip_gen: v6e
topology: v6e:2x2x1
jax: 0.10.0
libtpu: 0.0.40
codegen_flags: <defaults>
</compile_context>

<pallas_src>
import random
from functools import lru_cache

import numpy as np
import jax
import jax.numpy as jnp
from jax.experimental import pallas as pl
from jax.experimental.pallas import tpu as pltpu

SR = 32000
STEPS = (-3.0, 3.0)
P = 1.0
BINS_PER_OCTAVE = 12

N_FFT = 128
HOP = 32
N_BINS = N_FFT // 2 + 1          # 65 physical rFFT bins
NB_PAD = 128                     # lane-padded bin count (multiple of 128)
R = N_FFT // HOP                 # overlap-add ratio (4)

VMEM_LIMIT = 32 * 1024 * 1024    # <= v7x physical VMEM headroom; fine on v5e/v6e


def _round_up(v, m):
    return ((v + m - 1) // m) * m


def _tile_m(m0):
    # aim for >=4 grid steps (so v7x's 2 TensorCores both get work), 8-row aligned, cap at 512.
    tm = _round_up(max(-(-m0 // 4), 8), 8)
    return min(tm, 512)


# ----------------------------- Pallas kernels --------------------------------

def _stft_kernel(frames_ref, basis_ref, out_ref):
    # bf16 frames (tm, 128) @ bf16 [win*cos | -win*sin] basis (128, 256) -> f32 (tm, 256) re|im slab
    out_ref[...] = jnp.dot(frames_ref[...], basis_ref[...],
                           preferred_element_type=jnp.float32)


def _pv_istft_kernel(mag0_ref, mag1_ref, alpha_ref, phase_ref, basis_ref, out_ref):
    # fused phase-vocoder magnitude lerp + exp(i*phase) + inverse DFT (synthesis window folded in basis)
    a = alpha_ref[...]                                     # (tm, 1) broadcast over bins
    mag = mag0_ref[...] + a * (mag1_ref[...] - mag0_ref[...])
    ph = phase_ref[...]
    re = (mag * jnp.cos(ph)).astype(jnp.bfloat16)          # EUP cos/sin overlap the MXU dot
    im = (mag * jnp.sin(ph)).astype(jnp.bfloat16)
    reim = jnp.concatenate([re, im], axis=1)               # (tm, 256), lane-aligned concat
    out_ref[...] = jnp.dot(reim, basis_ref[...], preferred_element_type=jnp.float32)


def _resample_kernel(y0_ref, y1_ref, w0_ref, w1_ref, out_ref):
    # linear-interp resample with the OLA window-sumsquare norm folded into w0/w1
    out_ref[...] = w0_ref[...] * y0_ref[...] + w1_ref[...] * y1_ref[...]


# --------------------------- pallas_call wrappers -----------------------------

def _stft_pallas(frames_bf16, dft_basis):
    m0 = frames_bf16.shape[0]
    tm = _tile_m(m0)
    m = _round_up(m0, tm)
    if m != m0:
        frames_bf16 = jnp.pad(frames_bf16, ((0, m - m0), (0, 0)))
    out = pl.pallas_call(
        _stft_kernel,
        grid=(m // tm,),
        in_specs=[
            pl.BlockSpec((tm, N_FFT), lambda i: (i, 0)),
            pl.BlockSpec((N_FFT, 2 * NB_PAD), lambda i: (0, 0)),
        ],
        out_specs=pl.BlockSpec((tm, 2 * NB_PAD), lambda i: (i, 0)),
        out_shape=jax.ShapeDtypeStruct((m, 2 * NB_PAD), jnp.float32),
        compiler_params=pltpu.CompilerParams(
            dimension_semantics=("parallel",),
            vmem_limit_bytes=VMEM_LIMIT),
    )(frames_bf16, dft_basis)
    return out[:m0]


def _pv_istft_pallas(mag0, mag1, alpha, phase, idft_basis):
    m0 = mag0.shape[0]
    tm = _tile_m(m0)
    m = _round_up(m0, tm)
    if m != m0:
        padr = ((0, m - m0), (0, 0))
        mag0 = jnp.pad(mag0, padr)
        mag1 = jnp.pad(mag1, padr)
        alpha = jnp.pad(alpha, padr)
        phase = jnp.pad(phase, padr)
    out = pl.pallas_call(
        _pv_istft_kernel,
        grid=(m // tm,),
        in_specs=[
            pl.BlockSpec((tm, NB_PAD), lambda i: (i, 0)),
            pl.BlockSpec((tm, NB_PAD), lambda i: (i, 0)),
            pl.BlockSpec((tm, 1), lambda i: (i, 0)),
            pl.BlockSpec((tm, NB_PAD), lambda i: (i, 0)),
            pl.BlockSpec((2 * NB_PAD, N_FFT), lambda i: (0, 0)),
        ],
        out_specs=pl.BlockSpec((tm, N_FFT), lambda i: (i, 0)),
        out_shape=jax.ShapeDtypeStruct((m, N_FFT), jnp.float32),
        compiler_params=pltpu.CompilerParams(
            dimension_semantics=("parallel",),
            vmem_limit_bytes=VMEM_LIMIT),
    )(mag0, mag1, alpha, phase, idft_basis)
    return out[:m0]


def _resample_pallas(y0, y1, w0, w1):
    B, T = y0.shape
    tile_t = min(2048, max(128, _round_up(-(-T // 4), 128)))
    tile_t = min(tile_t, _round_up(T, 128))
    Tp = _round_up(T, tile_t)
    tb = B if B <= 8 else 8
    Bp = _round_up(B, tb)
    if Tp != T or Bp != B:
        y0 = jnp.pad(y0, ((0, Bp - B), (0, Tp - T)))
        y1 = jnp.pad(y1, ((0, Bp - B), (0, Tp - T)))
        w0 = jnp.pad(w0, ((0, 0), (0, Tp - T)))
        w1 = jnp.pad(w1, ((0, 0), (0, Tp - T)))
    out = pl.pallas_call(
        _resample_kernel,
        grid=(Bp // tb, Tp // tile_t),
        in_specs=[
            pl.BlockSpec((tb, tile_t), lambda b, t: (b, t)),
            pl.BlockSpec((tb, tile_t), lambda b, t: (b, t)),
            pl.BlockSpec((1, tile_t), lambda b, t: (0, t)),
            pl.BlockSpec((1, tile_t), lambda b, t: (0, t)),
        ],
        out_specs=pl.BlockSpec((tb, tile_t), lambda b, t: (b, t)),
        out_shape=jax.ShapeDtypeStruct((Bp, Tp), jnp.float32),
        compiler_params=pltpu.CompilerParams(
            dimension_semantics=("parallel", "parallel"),
            vmem_limit_bytes=VMEM_LIMIT),
    )(y0, y1, w0, w1)
    return out[:B, :T]


# --------------------------- cached host constants -----------------------------

@lru_cache(maxsize=None)
def _np_window():
    m = np.arange(N_FFT)
    return (0.5 - 0.5 * np.cos(2.0 * np.pi * m / N_FFT))      # periodic Hann, float64


@lru_cache(maxsize=None)
def _constants():
    win = _np_window()

    # forward DFT basis with the analysis window folded in: [win*cos | -win*sin] -> (128, 256)
    n = np.arange(N_FFT)[:, None]
    k = np.arange(N_BINS)[None, :]
    ang = 2.0 * np.pi * n * k / N_FFT
    dft = np.zeros((N_FFT, 2 * NB_PAD), np.float32)
    dft[:, :N_BINS] = win[:, None] * np.cos(ang)
    dft[:, NB_PAD:NB_PAD + N_BINS] = -win[:, None] * np.sin(ang)

    # inverse DFT basis with the synthesis window folded into its columns: (256, 128)
    c = np.full((N_BINS,), 2.0)
    c[0] = 1.0
    c[-1] = 1.0
    kk = np.arange(N_BINS)[:, None]
    nn = np.arange(N_FFT)[None, :]
    ang2 = 2.0 * np.pi * kk * nn / N_FFT
    idft = np.zeros((2 * NB_PAD, N_FFT), np.float32)
    idft[:N_BINS] = (c[:, None] * np.cos(ang2)) / N_FFT * win[None, :]
    idft[NB_PAD:NB_PAD + N_BINS] = (-c[:, None] * np.sin(ang2)) / N_FFT * win[None, :]

    phi = np.zeros((NB_PAD,), np.float32)
    phi[:N_BINS] = np.linspace(0.0, np.pi * HOP, N_BINS)

    return dict(
        dft=jnp.asarray(dft, dtype=jnp.bfloat16),
        idft=jnp.asarray(idft, dtype=jnp.bfloat16),
        phi=jnp.asarray(phi),
    )


@lru_cache(maxsize=None)
def _ola_inv_norm(n_out):
    # window sum-square normalization for the overlap-add (host numpy, vectorized over 4 shifts)
    win = _np_window()
    w2 = (win * win).reshape(R, HOP)
    blocks = np.zeros((n_out + R - 1, HOP), np.float64)
    for k in range(R):
        blocks[k:k + n_out] += w2[k]
    wss = blocks.reshape(-1)
    return (1.0 / np.maximum(wss, 1e-8)).astype(np.float32)


# ------------------------------- jitted core -----------------------------------

@jax.jit
def _pitch_shift_core(x, i0, alpha, g0, g1, w0, w1):
    B, T = x.shape
    n_out = i0.shape[0]                 # padded to n_out_max -> shape (and executable) is rate-invariant
    consts = _constants()
    pad = N_FFT // 2
    two_pi = 2.0 * np.pi

    # ---- STFT (center reflect-pad; framing as 4 shifted 32-sample block views, no gather op) ----
    xf = x.astype(jnp.float32)
    x_pad = jnp.pad(xf, ((0, 0), (pad, pad)), mode="reflect")
    n_frames = 1 + (x_pad.shape[1] - N_FFT) // HOP
    # TODO(synk): build frames inside the STFT kernel from an ANY-space x_pad to cut the 4x read expansion.
    blocks = x_pad[:, :(n_frames + R - 1) * HOP].reshape(B, n_frames + R - 1, HOP)
    frames = jnp.concatenate([blocks[:, k:k + n_frames, :] for k in range(R)], axis=2)
    frames = frames.reshape(B * n_frames, N_FFT).astype(jnp.bfloat16)

    slab = _stft_pallas(frames, consts["dft"]).reshape(B, n_frames, 2 * NB_PAD)
    s_re = slab[..., :NB_PAD]
    s_im = slab[..., NB_PAD:]

    # TODO(synk): fold mag/arctan2 into the STFT kernel once Mosaic atan2 lowering is verified.
    mag = jnp.sqrt(s_re * s_re + s_im * s_im)
    phase = jnp.arctan2(s_im, s_re)

    # ---- phase vocoder bookkeeping (unwrap + cumsum; padded output frames hit zero-magnitude frames) ----
    mag_pad = jnp.pad(mag, ((0, 0), (0, 2), (0, 0)))
    phase_pad = jnp.pad(phase, ((0, 0), (0, 2), (0, 0)))
    mag0 = jnp.take(mag_pad, i0, axis=1)
    mag1 = jnp.take(mag_pad, i0 + 1, axis=1)
    ph0 = jnp.take(phase_pad, i0, axis=1)
    ph1 = jnp.take(phase_pad, i0 + 1, axis=1)

    phi = consts["phi"]
    dphase = ph1 - ph0 - phi
    dphase = dphase - two_pi * jnp.round(dphase / two_pi)
    incr = phi + dphase
    cum = jnp.cumsum(incr, axis=1)
    phase_acc = phase[:, :1, :] + jnp.concatenate(
        [jnp.zeros((B, 1, NB_PAD), jnp.float32), cum[:, :-1, :]], axis=1)
    phase_acc = phase_acc - two_pi * jnp.round(phase_acc / two_pi)   # keep cos/sin arguments small

    alpha_col = jnp.broadcast_to(alpha[None, :, None], (B, n_out, 1))

    # ---- fused phase-vocoder + inverse DFT + synthesis window (single kernel, one 256-wide dot) ----
    frames_t = _pv_istft_pallas(
        mag0.reshape(B * n_out, NB_PAD),
        mag1.reshape(B * n_out, NB_PAD),
        alpha_col.reshape(B * n_out, 1),
        phase_acc.reshape(B * n_out, NB_PAD),
        consts["idft"]).reshape(B, n_out, N_FFT)

    # ---- overlap-add: R shifted dense adds, fused by XLA under jit ----
    # TODO(synk): fuse OLA into the PV-ISTFT kernel with a per-batch resident accumulator block.
    chunks = frames_t.reshape(B, n_out, R, HOP)
    n_blocks = n_out + R - 1
    y_full = sum(
        jnp.pad(chunks[:, :, k, :], ((0, 0), (k, R - 1 - k), (0, 0)))
        for k in range(R)
    ).reshape(B, n_blocks * HOP)

    # ---- resample back to T samples: gather + tiled lerp kernel (norm folded into w0/w1) ----
    # TODO(synk): librosa uses band-limited (soxr/kaiser) resampling; linear interp here.
    y0 = jnp.take(y_full, g0, axis=1)
    y1 = jnp.take(y_full, g1, axis=1)
    y_out = _resample_pallas(y0, y1, w0[None, :], w1[None, :])
    return y_out.astype(x.dtype)


# ------------------------------- pitch shift ----------------------------------

def pitch_shift(x, n_steps, max_abs_steps=None):
    B, T = x.shape
    rate = 2.0 ** (-float(n_steps) / BINS_PER_OCTAVE)
    if max_abs_steps is None:
        max_abs_steps = abs(float(n_steps))
    max_abs_steps = max(float(max_abs_steps), abs(float(n_steps)))
    rate_min = 2.0 ** (-max_abs_steps / BINS_PER_OCTAVE)

    pad = N_FFT // 2
    t_pad = T + 2 * pad
    n_frames = 1 + (t_pad - N_FFT) // HOP

    time_steps = np.arange(0.0, float(n_frames), rate)
    n_out = len(time_steps)
    # pad to the worst-case frame count over the steps range -> one executable per (B, T)
    n_out_max = max(int(np.ceil(n_frames / rate_min)) + 1, n_out)

    i0 = np.full((n_out_max,), n_frames, np.int32)      # padded tail indexes zero frames -> silent
    alpha = np.zeros((n_out_max,), np.float32)
    i0_real = np.floor(time_steps).astype(np.int32)
    i0[:n_out] = i0_real
    alpha[:n_out] = (time_steps - i0_real).astype(np.float32)

    inv_wss = _ola_inv_norm(n_out)                      # (l_full_real,) host numpy, 1e-8 floor
    l_full = (n_out + R - 1) * HOP
    len_stretch = int(round(T / rate))
    take = min(len_stretch, l_full - pad)
    pos = np.arange(T, dtype=np.float64) / rate
    j0 = np.clip(np.floor(pos).astype(np.int64), 0, max(len_stretch - 1, 0))
    j1 = np.minimum(j0 + 1, max(len_stretch - 1, 0))
    frac = (pos - np.floor(pos)).astype(np.float32)
    g0 = np.minimum(pad + j0, l_full - 1)
    g1 = np.minimum(pad + j1, l_full - 1)
    w0 = ((1.0 - frac) * inv_wss[g0] * (j0 < take)).astype(np.float32)
    w1 = (frac * inv_wss[g1] * (j1 < take)).astype(np.float32)

    return _pitch_shift_core(
        x,
        jnp.asarray(i0), jnp.asarray(alpha),
        jnp.asarray(g0.astype(np.int32)), jnp.asarray(g1.astype(np.int32)),
        jnp.asarray(w0), jnp.asarray(w1))


class PitchShiftRandomPallas:
    """JAX/Pallas port of sslh PitchShiftRandom."""

    def __init__(self, sr: int = 32000, steps=(-3.0, 3.0), p: float = 1.0):
        self.sr = sr
        self.steps = steps
        self.p = p
        self._max_abs_steps = max(abs(float(steps[0])), abs(float(steps[1])))

    def __call__(self, x):
        if self.p >= 1.0 or random.random() <= self.p:
            n_steps = random.uniform(*self.steps)   # host-side draw, as in the PyTorch module
            return pitch_shift(x, n_steps, max_abs_steps=self._max_abs_steps)
        return x


if __name__ == "__main__":
    random.seed(0)  # deterministic n_steps
    key = jax.random.PRNGKey(0)
    x = jax.random.normal(key, (2, 1024), dtype=jnp.float32)  # [B, T] waveform

    module = PitchShiftRandomPallas(sr=SR, steps=STEPS, p=P)
    y = module(x)
    y = jax.block_until_ready(y)

    assert y.shape == x.shape, (y.shape, x.shape)
    assert y.dtype == x.dtype
    assert bool(jnp.all(jnp.isfinite(y)))
    print("KERNEL_OK")
</pallas_src>

<mosaic_0001>
module attributes {stable_mosaic.version = 11 : i64} {
  func.func @_stft_kernel(%arg0: i32, %arg1: memref<24x128xbf16, #tpu.memory_space<vmem>>, %arg2: memref<128x256xbf16, #tpu.memory_space<vmem>>, %arg3: memref<24x256xf32, #tpu.memory_space<vmem>>) attributes {dimension_semantics = [#tpu.dimension_semantics<parallel>], iteration_bounds = array<i64: 3>, scalar_prefetch = 0 : i64, scratch_operands = 0 : i64, tpu.core_type = #tpu.core_type<tc>, window_params = [{transform_indices = @transform_0, window_bounds = array<i64: 24, 128>}, {pipeline_mode = #tpu.pipeline_mode<synchronous>, transform_indices = @transform_1, window_bounds = array<i64: 128, 256>}, {transform_indices = @transform_2, window_bounds = array<i64: 24, 256>}]} {
    %c0 = arith.constant 0 : index
    %c0_0 = arith.constant 0 : index
    %0 = vector.load %arg1[%c0, %c0_0] : memref<24x128xbf16, #tpu.memory_space<vmem>>, vector<24x128xbf16>
    %c0_1 = arith.constant 0 : index
    %c0_2 = arith.constant 0 : index
    %1 = vector.load %arg2[%c0_1, %c0_2] : memref<128x256xbf16, #tpu.memory_space<vmem>>, vector<128x256xbf16>
    %cst = arith.constant dense<0.000000e+00> : vector<24x256xf32>
    %2 = tpu.matmul %0, %1, %cst {dimension_numbers = #tpu.dot_dimension_numbers<[1], [0], [0], [1], [0, 0, 1, 1], [], []>} : vector<24x128xbf16>, vector<128x256xbf16>, vector<24x256xf32> -> vector<24x256xf32>
    %c0_3 = arith.constant 0 : index
    %c0_4 = arith.constant 0 : index
    %3 = vector.load %arg3[%c0_3, %c0_4] : memref<24x256xf32, #tpu.memory_space<vmem>>, vector<24x256xf32>
    tpu.vector_store %arg3[%c0_3, %c0_4], %2 {strides = array<i32>} : memref<24x256xf32, #tpu.memory_space<vmem>>, vector<24x256xf32>,
    return
  }
  func.func @transform_0(%arg0: i32) -> (i32, i32) {
    %c0_i32 = arith.constant 0 : i32
    %c0_i32_0 = arith.constant 0 : i32
    return %arg0, %c0_i32 : i32, i32
  }
  func.func @transform_1(%arg0: i32) -> (i32, i32) {
    %c0_i32 = arith.constant 0 : i32
    %c0_i32_0 = arith.constant 0 : i32
    %c0_i32_1 = arith.constant 0 : i32
    return %c0_i32, %c0_i32_0 : i32, i32
  }
  func.func @transform_2(%arg0: i32) -> (i32, i32) {
    %c0_i32 = arith.constant 0 : i32
    %c0_i32_0 = arith.constant 0 : i32
    return %arg0, %c0_i32 : i32, i32
  }
}

module attributes {stable_mosaic.version = 11 : i64} {
  func.func @_pv_istft_kernel(%arg0: i32, %arg1: memref<24x128xf32, #tpu.memory_space<vmem>>, %arg2: memref<24x128xf32, #tpu.memory_space<vmem>>, %arg3: memref<24x1xf32, #tpu.memory_space<vmem>>, %arg4: memref<24x128xf32, #tpu.memory_space<vmem>>, %arg5: memref<256x128xbf16, #tpu.memory_space<vmem>>, %arg6: memref<24x128xf32, #tpu.memory_space<vmem>>) attributes {dimension_semantics = [#tpu.dimension_semantics<parallel>], iteration_bounds = array<i64: 4>, scalar_prefetch = 0 : i64, scratch_operands = 0 : i64, tpu.core_type = #tpu.core_type<tc>, window_params = [{transform_indices = @transform_0, window_bounds = array<i64: 24, 128>}, {transform_indices = @transform_1, window_bounds = array<i64: 24, 128>}, {transform_indices = @transform_2, window_bounds = array<i64: 24, 1>}, {transform_indices = @transform_3, window_bounds = array<i64: 24, 128>}, {pipeline_mode = #tpu.pipeline_mode<synchronous>, transform_indices = @transform_4, window_bounds = array<i64: 256, 128>}, {transform_indices = @transform_5, window_bounds = array<i64: 24, 128>}]} {
    %c0 = arith.constant 0 : index
    %c0_0 = arith.constant 0 : index
    %0 = vector.load %arg3[%c0, %c0_0] : memref<24x1xf32, #tpu.memory_space<vmem>>, vector<24x1xf32>
    %c0_1 = arith.constant 0 : index
    %c0_2 = arith.constant 0 : index
    %1 = vector.load %arg1[%c0_1, %c0_2] : memref<24x128xf32, #tpu.memory_space<vmem>>, vector<24x128xf32>
    %c0_3 = arith.constant 0 : index
    %c0_4 = arith.constant 0 : index
    %2 = vector.load %arg2[%c0_3, %c0_4] : memref<24x128xf32, #tpu.memory_space<vmem>>, vector<24x128xf32>
    %c0_5 = arith.constant 0 : index
    %c0_6 = arith.constant 0 : index
    %3 = vector.load %arg1[%c0_5, %c0_6] : memref<24x128xf32, #tpu.memory_space<vmem>>, vector<24x128xf32>
    %4 = arith.subf %2, %3 : vector<24x128xf32>
    %5 = vector.broadcast %0 : vector<24x1xf32> to vector<24x128xf32>
    %6 = arith.mulf %5, %4 : vector<24x128xf32>
    %7 = arith.addf %1, %6 : vector<24x128xf32>
    %c0_7 = arith.constant 0 : index
    %c0_8 = arith.constant 0 : index
    %8 = vector.load %arg4[%c0_7, %c0_8] : memref<24x128xf32, #tpu.memory_space<vmem>>, vector<24x128xf32>
    %9 = math.cos %8 : vector<24x128xf32>
    %10 = arith.mulf %7, %9 : vector<24x128xf32>
    %11 = arith.truncf %10 : vector<24x128xf32> to vector<24x128xbf16>
    %12 = math.sin %8 : vector<24x128xf32>
    %13 = arith.mulf %7, %12 : vector<24x128xf32>
    %14 = arith.truncf %13 : vector<24x128xf32> to vector<24x128xbf16>
    %15 = tpu.concatenate %11, %14 in 1 : vector<24x128xbf16>, vector<24x128xbf16> -> vector<24x256xbf16>
    %c0_9 = arith.constant 0 : index
    %c0_10 = arith.constant 0 : index
    %16 = vector.load %arg5[%c0_9, %c0_10] : memref<256x128xbf16, #tpu.memory_space<vmem>>, vector<256x128xbf16>
    %cst = arith.constant dense<0.000000e+00> : vector<24x128xf32>
    %17 = tpu.matmul %15, %16, %cst {dimension_numbers = #tpu.dot_dimension_numbers<[1], [0], [0], [1], [0, 0, 1, 1], [], []>} : vector<24x256xbf16>, vector<256x128xbf16>, vector<24x128xf32> -> vector<24x128xf32>
    %c0_11 = arith.constant 0 : index
    %c0_12 = arith.constant 0 : index
    %18 = vector.load %arg6[%c0_11, %c0_12] : memref<24x128xf32, #tpu.memory_space<vmem>>, vector<24x128xf32>
    tpu.vector_store %arg6[%c0_11, %c0_12], %17 {strides = array<i32>} : memref<24x128xf32, #tpu.memory_space<vmem>>, vector<24x128xf32>,
    return
  }
  func.func @transform_0(%arg0: i32) -> (i32, i32) {
    %c0_i32 = arith.constant 0 : i32
    %c0_i32_0 = arith.constant 0 : i32
    return %arg0, %c0_i32 : i32, i32
  }
  func.func @transform_1(%arg0: i32) -> (i32, i32) {
    %c0_i32 = arith.constant 0 : i32
    %c0_i32_0 = arith.constant 0 : i32
    return %arg0, %c0_i32 : i32, i32
  }
  func.func @transform_2(%arg0: i32) -> (i32, i32) {
    %c0_i32 = arith.constant 0 : i32
    %c0_i32_0 = arith.constant 0 : i32
    return %arg0, %c0_i32 : i32, i32
  }
  func.func @transform_3(%arg0: i32) -> (i32, i32) {
    %c0_i32 = arith.constant 0 : i32
    %c0_i32_0 = arith.constant 0 : i32
    return %arg0, %c0_i32 : i32, i32
  }
  func.func @transform_4(%arg0: i32) -> (i32, i32) {
    %c0_i32 = arith.constant 0 : i32
    %c0_i32_0 = arith.constant 0 : i32
    %c0_i32_1 = arith.constant 0 : i32
    return %c0_i32, %c0_i32_0 : i32, i32
  }
  func.func @transform_5(%arg0: i32) -> (i32, i32) {
    %c0_i32 = arith.constant 0 : i32
    %c0_i32_0 = arith.constant 0 : i32
    return %arg0, %c0_i32 : i32, i32
  }
}

module attributes {stable_mosaic.version = 11 : i64} {
  func.func @_resample_kernel(%arg0: i32, %arg1: i32, %arg2: memref<2x256xf32, #tpu.memory_space<vmem>>, %arg3: memref<2x256xf32, #tpu.memory_space<vmem>>, %arg4: memref<1x256xf32, #tpu.memory_space<vmem>>, %arg5: memref<1x256xf32, #tpu.memory_space<vmem>>, %arg6: memref<2x256xf32, #tpu.memory_space<vmem>>) attributes {dimension_semantics = [#tpu.dimension_semantics<parallel>, #tpu.dimension_semantics<parallel>], iteration_bounds = array<i64: 1, 4>, scalar_prefetch = 0 : i64, scratch_operands = 0 : i64, tpu.core_type = #tpu.core_type<tc>, window_params = [{transform_indices = @transform_0, window_bounds = array<i64: 2, 256>}, {transform_indices = @transform_1, window_bounds = array<i64: 2, 256>}, {transform_indices = @transform_2, window_bounds = array<i64: 1, 256>}, {transform_indices = @transform_3, window_bounds = array<i64: 1, 256>}, {transform_indices = @transform_4, window_bounds = array<i64: 2, 256>}]} {
    %c0 = arith.constant 0 : index
    %c0_0 = arith.constant 0 : index
    %0 = vector.load %arg4[%c0, %c0_0] : memref<1x256xf32, #tpu.memory_space<vmem>>, vector<1x256xf32>
    %c0_1 = arith.constant 0 : index
    %c0_2 = arith.constant 0 : index
    %1 = vector.load %arg2[%c0_1, %c0_2] : memref<2x256xf32, #tpu.memory_space<vmem>>, vector<2x256xf32>
    %2 = vector.broadcast %0 : vector<1x256xf32> to vector<2x256xf32>
    %3 = arith.mulf %2, %1 : vector<2x256xf32>
    %c0_3 = arith.constant 0 : index
    %c0_4 = arith.constant 0 : index
    %4 = vector.load %arg5[%c0_3, %c0_4] : memref<1x256xf32, #tpu.memory_space<vmem>>, vector<1x256xf32>
    %c0_5 = arith.constant 0 : index
    %c0_6 = arith.constant 0 : index
    %5 = vector.load %arg3[%c0_5, %c0_6] : memref<2x256xf32, #tpu.memory_space<vmem>>, vector<2x256xf32>
    %6 = vector.broadcast %4 : vector<1x256xf32> to vector<2x256xf32>
    %7 = arith.mulf %6, %5 : vector<2x256xf32>
    %8 = arith.addf %3, %7 : vector<2x256xf32>
    %c0_7 = arith.constant 0 : index
    %c0_8 = arith.constant 0 : index
    %9 = vector.load %arg6[%c0_7, %c0_8] : memref<2x256xf32, #tpu.memory_space<vmem>>, vector<2x256xf32>
    tpu.vector_store %arg6[%c0_7, %c0_8], %8 {strides = array<i32>} : memref<2x256xf32, #tpu.memory_space<vmem>>, vector<2x256xf32>,
    return
  }
  func.func @transform_0(%arg0: i32, %arg1: i32) -> (i32, i32) {
    %c0_i32 = arith.constant 0 : i32
    return %arg0, %arg1 : i32, i32
  }
  func.func @transform_1(%arg0: i32, %arg1: i32) -> (i32, i32) {
    %c0_i32 = arith.constant 0 : i32
    return %arg0, %arg1 : i32, i32
  }
  func.func @transform_2(%arg0: i32, %arg1: i32) -> (i32, i32) {
    %c0_i32 = arith.constant 0 : i32
    %c0_i32_0 = arith.constant 0 : i32
    return %c0_i32, %arg1 : i32, i32
  }
  func.func @transform_3(%arg0: i32, %arg1: i32) -> (i32, i32) {
    %c0_i32 = arith.constant 0 : i32
    %c0_i32_0 = arith.constant 0 : i32
    return %c0_i32, %arg1 : i32, i32
  }
  func.func @transform_4(%arg0: i32, %arg1: i32) -> (i32, i32) {
    %c0_i32 = arith.constant 0 : i32
    return %arg0, %arg1 : i32, i32
  }
}

</mosaic_0001>

<llo_original>
// kernel: _pitch_shift_core.3
$region0: #{_pitch_shift_core.3}
  #allocation0 [shape = 'u32[]', space=smem, size = 0x4, offset = 0x4, fixed_abs, tag = 'smem constant byte address 0x4 - core index']
  #allocation1 [shape = 'u32[144,128]{1,0:T(1,128)}', space=vmem, size = 0x12000, scoped, tag = 'internal scratch']
  %s0 = inlined_call_operand.vmem [shape: bf16[72,128], index: 0, kind: input, shape index: {}]
  %s1 = inlined_call_operand.vmem [shape: bf16[128,256], index: 1, kind: input, shape index: {}]
  %s2 = inlined_call_operand.vmem [shape: f32[72,256], index: 2, kind: output, shape index: {}]
  %s3 = sld [smem:[#allocation0]]
  $region41: #{_pitch_shift_core.3} parent=0
    _
  %s5 = ssub.s32 1, %s3
  %s6 = scalar_select 0, %s5, %s3
  loop: start=0, step=1, limit=5
  $region2: #{_pitch_shift_core.3} parent=0 // loop_pre_header
    _
  $region3: #{_pitch_shift_core.3} parent=0 // loop_header
    %s8 = sphi 0, %s12
    %p9 = scmp.ge.s32.totalorder %s8, 5
    %s18 = sphi 0, %s20
    %s21 = sphi 0, %s18
    %s22 = sphi 0, %s21
    %s38 = sphi 0, %s22
    %s42 = sphi 0, %s42
    %s44 = sphi 0, %s42
    %s45 = sphi 0, %s44
    %s59 = sphi 0, %s45
    %s65 = sphi 0, %s67
    %s68 = sphi 0, %s65
    %s69 = sphi 0, %s68
    %s85 = sphi 0, %s69
  $region4: #{_pitch_shift_core.3} parent=0 // loop_header_branch
    %11 = sbr.rel (%p9) target = $region8
  $region5: #{_pitch_shift_core.3} parent=0 // loop_body
    %s13 = ssub.s32 %s8, 1
    %s14 = ssub.s32 %s8, 2
    %s15 = sadd.s32 %s8, 1
    %s16 = ssub.s32 %s8, %s15
    %p17 = scmp.eq.s32.totalorder %s16, 0
    %s19 = sadd.s32 %s18, 1
    %s20 = scalar_select %p17, %s18, %s19
    %p23 = pneg %p17
    %p24 = scmp.eq.s32.totalorder %s8, 2
    %p25 = por %p23, %p24
    %p26 = scmp.ne.s32.totalorder %s18, %s21
    %p27 = scmp.eq.s32.totalorder %s8, 0
    %p28 = por %p26, %p27
    %p29 = scmp.ne.s32.totalorder %s18, %s21
    %p30 = scmp.eq.s32.totalorder %s13, 2
    %p31 = por %p29, %p30
    %p32 = scmp.ne.s32.totalorder %s21, %s22
    %p33 = scmp.eq.s32.totalorder %s13, 0
    %p34 = por %p32, %p33
    %p35 = scmp.ne.s32.totalorder %s21, %s22
    %p36 = scmp.eq.s32.totalorder %s14, 2
    %p37 = por %p35, %p36
    %p39 = scmp.ne.s32.totalorder %s22, %s38
    %p40 = scmp.eq.s32.totalorder %s14, 0
    %p41 = por %p39, %p40
    %s43 = sadd.s32 %s42, 1
    %p46 = scmp.eq.s32.totalorder %s8, 2
    %p47 = scmp.ne.s32.totalorder %s42, %s44
    %p48 = scmp.eq.s32.totalorder %s8, 0
    %p49 = por %p47, %p48
    %p50 = scmp.ne.s32.totalorder %s42, %s44
    %p51 = scmp.eq.s32.totalorder %s13, 2
    %p52 = por %p50, %p51
    %p53 = scmp.ne.s32.totalorder %s44, %s45
    %p54 = scmp.eq.s32.totalorder %s13, 0
    %p55 = por %p53, %p54
    %p56 = scmp.ne.s32.totalorder %s44, %s45
    %p57 = scmp.eq.s32.totalorder %s14, 2
    %p58 = por %p56, %p57
    %p60 = scmp.ne.s32.totalorder %s45, %s59
    %p61 = scmp.eq.s32.totalorder %s14, 0
    %p62 = por %p60, %p61
    %s63 = ssub.s32 %s8, %s15
    %p64 = scmp.eq.s32.totalorder %s63, 0
    %s66 = sadd.s32 %s65, 1
    %s67 = scalar_select %p64, %s65, %s66
    %p70 = pneg %p64
    %p71 = scmp.eq.s32.totalorder %s8, 2
    %p72 = por %p70, %p71
    %p73 = scmp.ne.s32.totalorder %s65, %s68
    %p74 = scmp.eq.s32.totalorder %s8, 0
    %p75 = por %p73, %p74
    %p76 = scmp.ne.s32.totalorder %s65, %s68
    %p77 = scmp.eq.s32.totalorder %s13, 2
    %p78 = por %p76, %p77
    %p79 = scmp.ne.s32.totalorder %s68, %s69
    %p80 = scmp.eq.s32.totalorder %s13, 0
    %p81 = por %p79, %p80
    %p82 = scmp.ne.s32.totalorder %s68, %s69
    %p83 = scmp.eq.s32.totalorder %s14, 2
    %p84 = por %p82, %p83
    %p86 = scmp.ne.s32.totalorder %s69, %s85
    %p87 = scmp.eq.s32.totalorder %s14, 0
    %p88 = por %p86, %p87
    %p89 = scmp.le.s32.totalorder 1, %s8
    %p90 = scmp.lt.s32.totalorder %s8, 4
    %p91 = pnand %p89, %p90
    %p92 = pneg %p91
    // Predicated region
    $region9: #{_pitch_shift_core.3} parent=5 // pred_check
      _
    $region10: #{_pitch_shift_core.3} parent=5 // pred_check_branch
      %94 = sbr.rel (%p91) target = $region12
    $region11: #{_pitch_shift_core.3} parent=5 // pred_region
      %s95 = ssub.s32 %s8, 1
      // Predicated region
      $region13: #{_pitch_shift_core.3} parent=11 // pred_check
        %p96 = pneg %p55
      $region14: #{_pitch_shift_core.3} parent=11 // pred_check_branch
        %98 = sbr.rel (%p96) target = $region16
      $region15: #{_pitch_shift_core.3} parent=11 // pred_region
        _
      $region16: #{_pitch_shift_core.3} parent=11 // pred_fallthru
        _
    $region12: #{_pitch_shift_core.3} parent=5 // pred_fallthru
      _
    %p99 = scmp.lt.s32.totalorder %s8, 3
    // Predicated region
    $region17: #{_pitch_shift_core.3} parent=5 // pred_check
      %p100 = pneg %p99
    $region18: #{_pitch_shift_core.3} parent=5 // pred_check_branch
      %102 = sbr.rel (%p100) target = $region20
    $region19: #{_pitch_shift_core.3} parent=5 // pred_region
      // Predicated region
      $region21: #{_pitch_shift_core.3} parent=19 // pred_check
        %p103 = pneg %p28
      $region22: #{_pitch_shift_core.3} parent=19 // pred_check_branch
        %105 = sbr.rel (%p103) target = $region24
      $region23: #{_pitch_shift_core.3} parent=19 // pred_region
        %s106 = smul.u32 3, %s8
        %p107 = scmp.lt.s32.totalorder %s106, 8
        %s108 = scalar_select %p107, %s106, 8
        %s109 = smul.addr %s108, 4
        %s110 = scalar_lea.vmem %s0, %s109
        %s111 = smul.u32 3, %s8
      $region24: #{_pitch_shift_core.3} parent=19 // pred_fallthru
        _
    $region20: #{_pitch_shift_core.3} parent=5 // pred_fallthru
      _
    %p112 = scmp.le.s32.totalorder 1, %s8
    %p113 = scmp.lt.s32.totalorder %s8, 4
    %p114 = pnand %p112, %p113
    %p115 = pneg %p114
    // Predicated region
    $region25: #{_pitch_shift_core.3} parent=5 // pred_check
      _
    $region26: #{_pitch_shift_core.3} parent=5 // pred_check_branch
      %117 = sbr.rel (%p114) target = $region28
    $region27: #{_pitch_shift_core.3} parent=5 // pred_region
      %s118 = ssub.s32 %s8, 1
      %s119 = smul.u32 3, %s13
      %p120 = scmp.lt.s32.totalorder %s119, 8
      %s121 = scalar_select %p120, %s119, 8
      %s122 = smul.addr %s121, 4
      %s123 = scalar_lea.vmem %s0, %s122
      %p124 = pneg %p34
      %p125 = pneg %p31
      %p126 = pneg %p55
      %p127 = pneg %p52
      %p128 = pneg %p81
      %p129 = pneg %p78
      %s130 = smul.u32 3, %s13
      %p131 = scmp.lt.s32.totalorder %s130, 8
      %s132 = scalar_select %p131, %s130, 8
      %s133 = smul.addr %s132, 2
      %s134 = smul.addr %s133, 8
      %s135 = scalar_lea.vmem %s2, %s134
      %s136 = smul.u32 3, %s13
      %p137 = scmp.lt.s32.totalorder %s136, 8
      %s138 = scalar_select %p137, %s136, 8
      %s139 = smul.addr %s138, 4
      %s140 = scalar_lea.vmem %s0, %s139
      %s141 = smul.u32 3, %s13
      %s142 = smul.u32 3, %s13
      %p143 = scmp.lt.s32.totalorder %s142, 8
      %s144 = scalar_select %p143, %s142, 8
      %s145 = smul.addr %s144, 2
      %s146 = smul.addr %s145, 8
      %s147 = scalar_lea.vmem %s2, %s146
      %s148 = smul.u32 3, %s13
      %v150 = vld [vmem:[%s140] sm:$0xf]
      %v151 = vld [vmem:[%s140 + $0x4] sm:$0xf]
      %v152 = vld [vmem:[%s140 + $0x8] sm:$0xf]
      %v153 = vld [vmem:[%s1] sm:$0xff]
      %v154 = vld [vmem:[%s1 + $0x8] sm:$0xff]
      %v155 = vld [vmem:[%s1 + $0x10] sm:$0xff]
      %v156 = vld [vmem:[%s1 + $0x18] sm:$0xff]
      %v157 = vld [vmem:[%s1 + $0x20] sm:$0xff]
      %v158 = vld [vmem:[%s1 + $0x28] sm:$0xff]
      %v159 = vld [vmem:[%s1 + $0x30] sm:$0xff]
      %v160 = vld [vmem:[%s1 + $0x38] sm:$0xff]
      %v161 = vld [vmem:[%s1 + $0x40] sm:$0xff]
      %v162 = vld [vmem:[%s1 + $0x48] sm:$0xff]
      %v163 = vld [vmem:[%s1 + $0x50] sm:$0xff]
      %v164 = vld [vmem:[%s1 + $0x58] sm:$0xff]
      %v165 = vld [vmem:[%s1 + $0x60] sm:$0xff]
      %v166 = vld [vmem:[%s1 + $0x68] sm:$0xff]
      %v167 = vld [vmem:[%s1 + $0x70] sm:$0xff]
      %v168 = vld [vmem:[%s1 + $0x78] sm:$0xff]
      %v172 = vunpack.c.l.b16 %v150
      %v173 = vunpack.c.l.b16 %v151
      %v174 = vunpack.c.l.b16 %v152
      %v175 = vpack.c.b16 %v173, %v172
      %v176 = vpack.c.b16 %v174, %v174
      %v195 = vunpack.c.l.b16 %v153
      %v196 = vunpack.c.h.b16 %v153
      %v197 = vunpack.c.l.b16 %v154
      %v198 = vunpack.c.h.b16 %v154
      %v199 = vunpack.c.l.b16 %v155
      %v200 = vunpack.c.h.b16 %v155
      %v201 = vunpack.c.l.b16 %v156
      %v202 = vunpack.c.h.b16 %v156
      %v203 = vunpack.c.l.b16 %v157
      %v204 = vunpack.c.h.b16 %v157
      %v205 = vunpack.c.l.b16 %v158
      %v206 = vunpack.c.h.b16 %v158
      %v207 = vunpack.c.l.b16 %v159
      %v208 = vunpack.c.h.b16 %v159
      %v209 = vunpack.c.l.b16 %v160
      %v210 = vunpack.c.h.b16 %v160
      %v211 = vunpack.c.l.b16 %v161
      %v212 = vunpack.c.h.b16 %v161
      %v213 = vunpack.c.l.b16 %v162
      %v214 = vunpack.c.h.b16 %v162
      %v215 = vunpack.c.l.b16 %v163
      %v216 = vunpack.c.h.b16 %v163
      %v217 = vunpack.c.l.b16 %v164
      %v218 = vunpack.c.h.b16 %v164
      %v219 = vunpack.c.l.b16 %v165
      %v220 = vunpack.c.h.b16 %v165
      %v221 = vunpack.c.l.b16 %v166
      %v222 = vunpack.c.h.b16 %v166
      %v223 = vunpack.c.l.b16 %v167
      %v224 = vunpack.c.h.b16 %v167
      %v225 = vunpack.c.l.b16 %v168
      %v226 = vunpack.c.h.b16 %v168
      %v227 = vpack.c.b16 %v197, %v195
      %v228 = vpack.c.b16 %v198, %v196
      %v229 = vpack.c.b16 %v201, %v199
      %v230 = vpack.c.b16 %v202, %v200
      %v231 = vpack.c.b16 %v205, %v203
      %v232 = vpack.c.b16 %v206, %v204
      %v233 = vpack.c.b16 %v209, %v207
      %v234 = vpack.c.b16 %v210, %v208
      %v235 = vpack.c.b16 %v213, %v211
      %v236 = vpack.c.b16 %v214, %v212
      %v237 = vpack.c.b16 %v217, %v215
      %v238 = vpack.c.b16 %v218, %v216
      %v239 = vpack.c.b16 %v221, %v219
      %v240 = vpack.c.b16 %v222, %v220
      %v241 = vpack.c.b16 %v225, %v223
      %v242 = vpack.c.b16 %v226, %v224
      %259 = vmatprep.subr.bf16.mxu0 %v242
      %260 = vmatpush1.bf16.msra.mxu0 %v241
      %261 = vmatprep.subr.bf16.mxu0 %v240
      %262 = vmatpush1.bf16.msra.mxu0 %v239
      %263 = vmatprep.subr.bf16.mxu0 %v238
      %264 = vmatpush1.bf16.msra.mxu0 %v237
      %265 = vmatprep.subr.bf16.mxu0 %v236
      %266 = vmatpush1.bf16.msra.mxu0 %v235
      %267 = vmatprep.subr.bf16.mxu0 %v234
      %268 = vmatpush1.bf16.msra.mxu0 %v233
      %269 = vmatprep.subr.bf16.mxu0 %v232
      %270 = vmatpush1.bf16.msra.mxu0 %v231
      %271 = vmatprep.subr.bf16.mxu0 %v230
      %272 = vmatpush1.bf16.msra.mxu0 %v229
      %273 = vmatprep.subr.bf16.mxu0 %v228
      %274 = vmatpush1.bf16.msra.mxu0 %v227
      %275 = vmatprep.subr.bf16.mxu0 0
      %276 = vmatpush2.bf16.msra.mxu0 0
      %277 = vmatprep.subr.bf16.mxu0 0
      %278 = vmatpush2.bf16.msra.mxu0 0
      %279 = vmatprep.subr.bf16.mxu0 0
      %280 = vmatpush2.bf16.msra.mxu0 0
      %281 = vmatprep.subr.bf16.mxu0 0
      %282 = vmatpush2.bf16.msra.mxu0 0
      %283 = vmatprep.subr.bf16.mxu0 0
      %284 = vmatpush2.bf16.msra.mxu0 0
      %285 = vmatprep.subr.bf16.mxu0 0
      %286 = vmatpush2.bf16.msra.mxu0 0
      %287 = vmatprep.subr.bf16.mxu0 0
      %288 = vmatpush2.bf16.msra.mxu0 0
      %289 = vmatprep.subr.bf16.mxu0 0
      %290 = vmatpush2.bf16.msra.mxu0 0
      %291 = vmatprep.mubr.bf16.mxu0 0
      %292 = vmatmul.mubr.bf16.gmra.mxu0 %v175
      %v293 = vpop.f32.mrf.mxu0
      %v294 = vadd.f32 0.0, %v293
      %v295 = vpop.f32.mrf.mxu0
      %v296 = vadd.f32 0.0, %v295
      %v297 = vpop.f32.mrf.mxu0
      %v298 = vadd.f32 0.0, %v297
      %v299 = vpop.f32.mrf.mxu0
      %v300 = vadd.f32 0.0, %v299
      %301 = vmatprep.mubr.bf16.mxu0 0
      %302 = vmatmul.mubr.bf16.gmra.mxu0 %v176
      %v303 = vpop.f32.mrf.mxu0
      %v304 = vadd.f32 0.0, %v303
      %v305 = vpop.f32.mrf.mxu0
      %v306 = vadd.f32 0.0, %v305
      %v307 = vpop.f32.mrf.mxu0
      %v308 = vpop.f32.mrf.mxu0
      %309 = vdwg.mxu0
      %310 = vst [vmem:[%s147] sm:$0xff] %v294
      %311 = vst [vmem:[%s147 + $0x8] sm:$0xff] %v296
      %312 = vst [vmem:[%s147 + $0x10] sm:$0xff] %v298
      %313 = vst [vmem:[%s147 + $0x18] sm:$0xff] %v300
      %314 = vst [vmem:[%s147 + $0x20] sm:$0xff] %v304
      %315 = vst [vmem:[%s147 + $0x28] sm:$0xff] %v306
      %s316 = smul.u32 3, %s13
      %p317 = scmp.lt.s32.totalorder %s316, 8
      %s318 = scalar_select %p317, %s316, 8
      %s319 = smul.addr %s318, 2
      %s320 = smul.addr %s319, 8
      %s321 = scalar_lea.vmem %s2, %s320
      // Predicated region
      $region29: #{_pitch_shift_core.3} parent=27 // pred_check
        %p322 = pneg %p78
      $region30: #{_pitch_shift_core.3} parent=27 // pred_check_branch
        %324 = sbr.rel (%p322) target = $region32
      $region31: #{_pitch_shift_core.3} parent=27 // pred_region
        %s325 = smul.u32 3, %s13
      $region32: #{_pitch_shift_core.3} parent=27 // pred_fallthru
        _
    $region28: #{_pitch_shift_core.3} parent=5 // pred_fallthru
      _
    %p326 = scmp.le.s32.totalorder 2, %s8
    // Predicated region
    $region33: #{_pitch_shift_core.3} parent=5 // pred_check
      %p327 = pneg %p326
    $region34: #{_pitch_shift_core.3} parent=5 // pred_check_branch
      %329 = sbr.rel (%p327) target = $region36
    $region35: #{_pitch_shift_core.3} parent=5 // pred_region
      %s330 = ssub.s32 %s8, 2
      // Predicated region
      $region37: #{_pitch_shift_core.3} parent=35 // pred_check
        %p331 = pneg %p84
      $region38: #{_pitch_shift_core.3} parent=35 // pred_check_branch
        %333 = sbr.rel (%p331) target = $region40
      $region39: #{_pitch_shift_core.3} parent=35 // pred_region
        %s334 = smul.u32 3, %s14
        %p335 = scmp.lt.s32.totalorder %s334, 8
        %s336 = scalar_select %p335, %s334, 8
        %s337 = smul.addr %s336, 2
        %s338 = smul.addr %s337, 8
        %s339 = scalar_lea.vmem %s2, %s338
      $region40: #{_pitch_shift_core.3} parent=35 // pred_fallthru
        _
    $region36: #{_pitch_shift_core.3} parent=5 // pred_fallthru
      _
  $region6: #{_pitch_shift_core.3} parent=0 // loop_footer
    %s12 = sadd.s32 1, %s8
  $region7: #{_pitch_shift_core.3} parent=0 // loop_footer_branch
    %7 = sbr.rel target = $region3
  $region8: #{_pitch_shift_core.3} parent=0 // loop_exit
    _

// kernel: _pitch_shift_core.4
$region0: #{_pitch_shift_core.4}
  #allocation0 [shape = 'u32[]', space=smem, size = 0x4, offset = 0x4, fixed_abs, tag = 'smem constant byte address 0x4 - core index']
  #allocation1 [shape = 'u32[144,128]{1,0:T(1,128)}', space=vmem, size = 0x12000, scoped, tag = 'internal scratch']
  %s0 = inlined_call_operand.vmem [shape: f32[96,128], index: 0, kind: input, shape index: {}]
  %s1 = inlined_call_operand.vmem [shape: f32[96,128], index: 1, kind: input, shape index: {}]
  %s2 = inlined_call_operand.vmem [shape: f32[96,1], index: 2, kind: input, shape index: {}]
  %s3 = inlined_call_operand.vmem [shape: f32[96,128], index: 3, kind: input, shape index: {}]
  %s4 = inlined_call_operand.vmem [shape: bf16[256,128], index: 4, kind: input, shape index: {}]
  %s5 = inlined_call_operand.vmem [shape: f32[96,128], index: 5, kind: output, shape index: {}]
  %s6 = sld [smem:[#allocation0]]
  $region53: #{_pitch_shift_core.4} parent=0
    _
  %s8 = ssub.s32 1, %s6
  %s9 = scalar_select 0, %s8, %s6
  loop: start=0, step=1, limit=6
  $region2: #{_pitch_shift_core.4} parent=0 // loop_pre_header
    _
  $region3: #{_pitch_shift_core.4} parent=0 // loop_header
    %s11 = sphi 0, %s15
    %p12 = scmp.ge.s32.totalorder %s11, 6
    %s21 = sphi 0, %s23
    %s24 = sphi 0, %s21
    %s25 = sphi 0, %s24
    %s41 = sphi 0, %s25
    %s47 = sphi 0, %s49
    %s50 = sphi 0, %s47
    %s51 = sphi 0, %s50
    %s67 = sphi 0, %s51
    %s73 = sphi 0, %s75
    %s76 = sphi 0, %s73
    %s77 = sphi 0, %s76
    %s93 = sphi 0, %s77
    %s99 = sphi 0, %s101
    %s102 = sphi 0, %s99
    %s103 = sphi 0, %s102
    %s119 = sphi 0, %s103
    %s123 = sphi 0, %s123
    %s125 = sphi 0, %s123
    %s126 = sphi 0, %s125
    %s140 = sphi 0, %s126
    %s146 = sphi 0, %s148
    %s149 = sphi 0, %s146
    %s150 = sphi 0, %s149
    %s166 = sphi 0, %s150
  $region4: #{_pitch_shift_core.4} parent=0 // loop_header_branch
    %14 = sbr.rel (%p12) target = $region8
  $region5: #{_pitch_shift_core.4} parent=0 // loop_body
    %s16 = ssub.s32 %s11, 1
    %s17 = ssub.s32 %s11, 2
    %s18 = sadd.s32 %s11, 1
    %s19 = ssub.s32 %s11, %s18
    %p20 = scmp.eq.s32.totalorder %s19, 0
    %s22 = sadd.s32 %s21, 1
    %s23 = scalar_select %p20, %s21, %s22
    %p26 = pneg %p20
    %p27 = scmp.eq.s32.totalorder %s11, 3
    %p28 = por %p26, %p27
    %p29 = scmp.ne.s32.totalorder %s21, %s24
    %p30 = scmp.eq.s32.totalorder %s11, 0
    %p31 = por %p29, %p30
    %p32 = scmp.ne.s32.totalorder %s21, %s24
    %p33 = scmp.eq.s32.totalorder %s16, 3
    %p34 = por %p32, %p33
    %p35 = scmp.ne.s32.totalorder %s24, %s25
    %p36 = scmp.eq.s32.totalorder %s16, 0
    %p37 = por %p35, %p36
    %p38 = scmp.ne.s32.totalorder %s24, %s25
    %p39 = scmp.eq.s32.totalorder %s17, 3
    %p40 = por %p38, %p39
    %p42 = scmp.ne.s32.totalorder %s25, %s41
    %p43 = scmp.eq.s32.totalorder %s17, 0
    %p44 = por %p42, %p43
    %s45 = ssub.s32 %s11, %s18
    %p46 = scmp.eq.s32.totalorder %s45, 0
    %s48 = sadd.s32 %s47, 1
    %s49 = scalar_select %p46, %s47, %s48
    %p52 = pneg %p46
    %p53 = scmp.eq.s32.totalorder %s11, 3
    %p54 = por %p52, %p53
    %p55 = scmp.ne.s32.totalorder %s47, %s50
    %p56 = scmp.eq.s32.totalorder %s11, 0
    %p57 = por %p55, %p56
    %p58 = scmp.ne.s32.totalorder %s47, %s50
    %p59 = scmp.eq.s32.totalorder %s16, 3
    %p60 = por %p58, %p59
    %p61 = scmp.ne.s32.totalorder %s50, %s51
    %p62 = scmp.eq.s32.totalorder %s16, 0
    %p63 = por %p61, %p62
    %p64 = scmp.ne.s32.totalorder %s50, %s51
    %p65 = scmp.eq.s32.totalorder %s17, 3
    %p66 = por %p64, %p65
    %p68 = scmp.ne.s32.totalorder %s51, %s67
    %p69 = scmp.eq.s32.totalorder %s17, 0
    %p70 = por %p68, %p69
    %s71 = ssub.s32 %s11, %s18
    %p72 = scmp.eq.s32.totalorder %s71, 0
    %s74 = sadd.s32 %s73, 1
    %s75 = scalar_select %p72, %s73, %s74
    %p78 = pneg %p72
    %p79 = scmp.eq.s32.totalorder %s11, 3
    %p80 = por %p78, %p79
    %p81 = scmp.ne.s32.totalorder %s73, %s76
    %p82 = scmp.eq.s32.totalorder %s11, 0
    %p83 = por %p81, %p82
    %p84 = scmp.ne.s32.totalorder %s73, %s76
    %p85 = scmp.eq.s32.totalorder %s16, 3
    %p86 = por %p84, %p85
    %p87 = scmp.ne.s32.totalorder %s76, %s77
    %p88 = scmp.eq.s32.totalorder %s16, 0
    %p89 = por %p87, %p88
    %p90 = scmp.ne.s32.totalorder %s76, %s77
    %p91 = scmp.eq.s32.totalorder %s17, 3
    %p92 = por %p90, %p91
    %p94 = scmp.ne.s32.totalorder %s77, %s93
    %p95 = scmp.eq.s32.totalorder %s17, 0
    %p96 = por %p94, %p95
    %s97 = ssub.s32 %s11, %s18
    %p98 = scmp.eq.s32.totalorder %s97, 0
    %s100 = sadd.s32 %s99, 1
    %s101 = scalar_select %p98, %s99, %s100
    %p104 = pneg %p98
    %p105 = scmp.eq.s32.totalorder %s11, 3
    %p106 = por %p104, %p105
    %p107 = scmp.ne.s32.totalorder %s99, %s102
    %p108 = scmp.eq.s32.totalorder %s11, 0
    %p109 = por %p107, %p108
    %p110 = scmp.ne.s32.totalorder %s99, %s102
    %p111 = scmp.eq.s32.totalorder %s16, 3
    %p112 = por %p110, %p111
    %p113 = scmp.ne.s32.totalorder %s102, %s103
    %p114 = scmp.eq.s32.totalorder %s16, 0
    %p115 = por %p113, %p114
    %p116 = scmp.ne.s32.totalorder %s102, %s103
    %p117 = scmp.eq.s32.totalorder %s17, 3
    %p118 = por %p116, %p117
    %p120 = scmp.ne.s32.totalorder %s103, %s119
    %p121 = scmp.eq.s32.totalorder %s17, 0
    %p122 = por %p120, %p121
    %s124 = sadd.s32 %s123, 1
    %p127 = scmp.eq.s32.totalorder %s11, 3
    %p128 = scmp.ne.s32.totalorder %s123, %s125
    %p129 = scmp.eq.s32.totalorder %s11, 0
    %p130 = por %p128, %p129
    %p131 = scmp.ne.s32.totalorder %s123, %s125
    %p132 = scmp.eq.s32.totalorder %s16, 3
    %p133 = por %p131, %p132
    %p134 = scmp.ne.s32.totalorder %s125, %s126
    %p135 = scmp.eq.s32.totalorder %s16, 0
    %p136 = por %p134, %p135
    %p137 = scmp.ne.s32.totalorder %s125, %s126
    %p138 = scmp.eq.s32.totalorder %s17, 3
    %p139 = por %p137, %p138
    %p141 = scmp.ne.s32.totalorder %s126, %s140
    %p142 = scmp.eq.s32.totalorder %s17, 0
    %p143 = por %p141, %p142
    %s144 = ssub.s32 %s11, %s18
    %p145 = scmp.eq.s32.totalorder %s144, 0
    %s147 = sadd.s32 %s146, 1
    %s148 = scalar_select %p145, %s146, %s147
    %p151 = pneg %p145
    %p152 = scmp.eq.s32.totalorder %s11, 3
    %p153 = por %p151, %p152
    %p154 = scmp.ne.s32.totalorder %s146, %s149
    %p155 = scmp.eq.s32.totalorder %s11, 0
    %p156 = por %p154, %p155
    %p157 = scmp.ne.s32.totalorder %s146, %s149
    %p158 = scmp.eq.s32.totalorder %s16, 3
    %p159 = por %p157, %p158
    %p160 = scmp.ne.s32.totalorder %s149, %s150
    %p161 = scmp.eq.s32.totalorder %s16, 0
    %p162 = por %p160, %p161
    %p163 = scmp.ne.s32.totalorder %s149, %s150
    %p164 = scmp.eq.s32.totalorder %s17, 3
    %p165 = por %p163, %p164
    %p167 = scmp.ne.s32.totalorder %s150, %s166
    %p168 = scmp.eq.s32.totalorder %s17, 0
    %p169 = por %p167, %p168
    %p170 = scmp.le.s32.totalorder 1, %s11
    %p171 = scmp.lt.s32.totalorder %s11, 5
    %p172 = pnand %p170, %p171
    %p173 = pneg %p172
    // Predicated region
    $region9: #{_pitch_shift_core.4} parent=5 // pred_check
      _
    $region10: #{_pitch_shift_core.4} parent=5 // pred_check_branch
      %175 = sbr.rel (%p172) target = $region12
    $region11: #{_pitch_shift_core.4} parent=5 // pred_region
      %s176 = ssub.s32 %s11, 1
      // Predicated region
      $region13: #{_pitch_shift_core.4} parent=11 // pred_check
        %p177 = pneg %p136
      $region14: #{_pitch_shift_core.4} parent=11 // pred_check_branch
        %179 = sbr.rel (%p177) target = $region16
      $region15: #{_pitch_shift_core.4} parent=11 // pred_region
        _
      $region16: #{_pitch_shift_core.4} parent=11 // pred_fallthru
        _
    $region12: #{_pitch_shift_core.4} parent=5 // pred_fallthru
      _
    %p180 = scmp.lt.s32.totalorder %s11, 4
    // Predicated region
    $region17: #{_pitch_shift_core.4} parent=5 // pred_check
      %p181 = pneg %p180
    $region18: #{_pitch_shift_core.4} parent=5 // pred_check_branch
      %183 = sbr.rel (%p181) target = $region20
    $region19: #{_pitch_shift_core.4} parent=5 // pred_region
      // Predicated region
      $region21: #{_pitch_shift_core.4} parent=19 // pred_check
        %p184 = pneg %p31
      $region22: #{_pitch_shift_core.4} parent=19 // pred_check_branch
        %186 = sbr.rel (%p184) target = $region24
      $region23: #{_pitch_shift_core.4} parent=19 // pred_region
        %s187 = smul.u32 3, %s11
        %p188 = scmp.lt.s32.totalorder %s187, 11
        %s189 = scalar_select %p188, %s187, 11
        %s190 = smul.addr %s189, 8
        %s191 = scalar_lea.vmem %s0, %s190
        %s192 = smul.u32 3, %s11
      $region24: #{_pitch_shift_core.4} parent=19 // pred_fallthru
        _
      // Predicated region
      $region25: #{_pitch_shift_core.4} parent=19 // pred_check
        %p193 = pneg %p57
      $region26: #{_pitch_shift_core.4} parent=19 // pred_check_branch
        %195 = sbr.rel (%p193) target = $region28
      $region27: #{_pitch_shift_core.4} parent=19 // pred_region
        %s196 = smul.u32 3, %s11
        %p197 = scmp.lt.s32.totalorder %s196, 11
        %s198 = scalar_select %p197, %s196, 11
        %s199 = smul.addr %s198, 8
        %s200 = scalar_lea.vmem %s1, %s199
        %s201 = smul.u32 3, %s11
      $region28: #{_pitch_shift_core.4} parent=19 // pred_fallthru
        _
      // Predicated region
      $region29: #{_pitch_shift_core.4} parent=19 // pred_check
        %p202 = pneg %p83
      $region30: #{_pitch_shift_core.4} parent=19 // pred_check_branch
        %204 = sbr.rel (%p202) target = $region32
      $region31: #{_pitch_shift_core.4} parent=19 // pred_region
        %s205 = smul.u32 3, %s11
        %p206 = scmp.lt.s32.totalorder %s205, 11
        %s207 = scalar_select %p206, %s205, 11
        %s208 = smul.addr %s207, 8
        %s209 = scalar_lea.vmem %s2, %s208
        %s210 = smul.u32 3, %s11
      $region32: #{_pitch_shift_core.4} parent=19 // pred_fallthru
        _
      // Predicated region
      $region33: #{_pitch_shift_core.4} parent=19 // pred_check
        %p211 = pneg %p109
      $region34: #{_pitch_shift_core.4} parent=19 // pred_check_branch
        %213 = sbr.rel (%p211) target = $region36
      $region35: #{_pitch_shift_core.4} parent=19 // pred_region
        %s214 = smul.u32 3, %s11
        %p215 = scmp.lt.s32.totalorder %s214, 11
        %s216 = scalar_select %p215, %s214, 11
        %s217 = smul.addr %s216, 8
        %s218 = scalar_lea.vmem %s3, %s217
        %s219 = smul.u32 3, %s11
      $region36: #{_pitch_shift_core.4} parent=19 // pred_fallthru
        _
    $region20: #{_pitch_shift_core.4} parent=5 // pred_fallthru
      _
    %p220 = scmp.le.s32.totalorder 1, %s11
    %p221 = scmp.lt.s32.totalorder %s11, 5
    %p222 = pnand %p220, %p221
    %p223 = pneg %p222
    // Predicated region
    $region37: #{_pitch_shift_core.4} parent=5 // pred_check
      _
    $region38: #{_pitch_shift_core.4} parent=5 // pred_check_branch
      %225 = sbr.rel (%p222) target = $region40
    $region39: #{_pitch_shift_core.4} parent=5 // pred_region
      %s226 = ssub.s32 %s11, 1
      %s227 = smul.u32 3, %s16
      %p228 = scmp.lt.s32.totalorder %s227, 11
      %s229 = scalar_select %p228, %s227, 11
      %s230 = smul.addr %s229, 8
      %s231 = scalar_lea.vmem %s0, %s230
      %p232 = pneg %p37
      %p233 = pneg %p34
      %s234 = smul.u32 3, %s16
      %p235 = scmp.lt.s32.totalorder %s234, 11
      %s236 = scalar_select %p235, %s234, 11
      %s237 = smul.addr %s236, 8
      %s238 = scalar_lea.vmem %s1, %s237
      %p239 = pneg %p63
      %p240 = pneg %p60
      %s241 = smul.u32 3, %s16
      %p242 = scmp.lt.s32.totalorder %s241, 11
      %s243 = scalar_select %p242, %s241, 11
      %s244 = smul.addr %s243, 8
      %s245 = scalar_lea.vmem %s2, %s244
      %p246 = pneg %p89
      %p247 = pneg %p86
      %s248 = smul.u32 3, %s16
      %p249 = scmp.lt.s32.totalorder %s248, 11
      %s250 = scalar_select %p249, %s248, 11
      %s251 = smul.addr %s250, 8
      %s252 = scalar_lea.vmem %s3, %s251
      %p253 = pneg %p115
      %p254 = pneg %p112
      %p255 = pneg %p136
      %p256 = pneg %p133
      %p257 = pneg %p162
      %p258 = pneg %p159
      %s259 = smul.u32 3, %s16
      %p260 = scmp.lt.s32.totalorder %s259, 11
      %s261 = scalar_select %p260, %s259, 11
      %s262 = smul.addr %s261, 8
      %s263 = scalar_lea.vmem %s5, %s262
      %s264 = smul.u32 3, %s16
      %p265 = scmp.lt.s32.totalorder %s264, 11
      %s266 = scalar_select %p265, %s264, 11
      %s267 = smul.addr %s266, 8
      %s268 = scalar_lea.vmem %s0, %s267
      %s269 = smul.u32 3, %s16
      %s270 = smul.u32 3, %s16
      %p271 = scmp.lt.s32.totalorder %s270, 11
      %s272 = scalar_select %p271, %s270, 11
      %s273 = smul.addr %s272, 8
      %s274 = scalar_lea.vmem %s1, %s273
      %s275 = smul.u32 3, %s16
      %s276 = smul.u32 3, %s16
      %p277 = scmp.lt.s32.totalorder %s276, 11
      %s278 = scalar_select %p277, %s276, 11
      %s279 = smul.addr %s278, 8
      %s280 = scalar_lea.vmem %s2, %s279
      %s281 = smul.u32 3, %s16
      %s282 = smul.u32 3, %s16
      %p283 = scmp.lt.s32.totalorder %s282, 11
      %s284 = scalar_select %p283, %s282, 11
      %s285 = smul.addr %s284, 8
      %s286 = scalar_lea.vmem %s3, %s285
      %s287 = smul.u32 3, %s16
      %s288 = smul.u32 3, %s16
      %p289 = scmp.lt.s32.totalorder %s288, 11
      %s290 = scalar_select %p289, %s288, 11
      %s291 = smul.addr %s290, 8
      %s292 = scalar_lea.vmem %s5, %s291
      %s293 = smul.u32 3, %s16
      %v295 = vld [vmem:[%s280] sm:$0xff]
      %v296 = vld [vmem:[%s280 + $0x8] sm:$0xff]
      %v297 = vld [vmem:[%s280 + $0x10] sm:$0xff]
      %v298 = vld [vmem:[%s268] sm:$0xff]
      %v299 = vld [vmem:[%s268 + $0x8] sm:$0xff]
      %v300 = vld [vmem:[%s268 + $0x10] sm:$0xff]
      %v301 = vld [vmem:[%s274] sm:$0xff]
      %v302 = vld [vmem:[%s274 + $0x8] sm:$0xff]
      %v303 = vld [vmem:[%s274 + $0x10] sm:$0xff]
      %v304 = vsub.f32 %v301, %v298
      %v305 = vsub.f32 %v302, %v299
      %v306 = vsub.f32 %v303, %v300
      %308 = vset.pattern.permute.xlu0 0
      %309 = vperm.xlu0 %308, %v295
      %v310 = vpop.permute.xlu0 %309
      %313 = vset.pattern.permute.xlu0 0
      %314 = vperm.xlu0 %313, %v296
      %v315 = vpop.permute.xlu0 %314
      %318 = vset.pattern.permute.xlu0 0
      %319 = vperm.xlu0 %318, %v297
      %v320 = vpop.permute.xlu0 %319
      %v322 = vmul.f32 %v310, %v304
      %v323 = vmul.f32 %v315, %v305
      %v324 = vmul.f32 %v320, %v306
      %v325 = vadd.f32 %v298, %v322
      %v326 = vadd.f32 %v299, %v323
      %v327 = vadd.f32 %v300, %v324
      %v328 = vld [vmem:[%s286] sm:$0xff]
      %v329 = vld [vmem:[%s286 + $0x8] sm:$0xff]
      %v330 = vld [vmem:[%s286 + $0x10] sm:$0xff]
      %v331 = vand.u32 2147483647, %v328
      %vm332 = vcmp.le.f32.partialorder %v331, 0.7853982
      %vm333 = vcmp.lt.s32.totalorder %v328, 0
      %v334 = vand.u32 %v328, 2139095040
      %v335 = vshrl.u32 %v334, 23
      %v336 = vsub.s32 %v335, 127
      %v337 = vand.u32 2147483647, %v328
      %v338 = vand.u32 %v337, 8388607
      %v339 = vor.u32 %v338, 8388608
      %v340 = vsub.s32 0, %v339
      %v341 = vadd.s32 %v336, 1
      %vm342 = vcmp.gt.s32.totalorder %v341, 0
      %v343 = vsel %vm342, %v341, 0
      %v344 = vshrl.u32 %v343, 5
      %v345 = vand.u32 %v343, 31
      %v346 = vsub.s32 32, %v345
      %v347 = vshrl.u32 683565275, %v346
      %v348 = vshll.u32 683565275, %v345
      %v349 = vshrl.u32 2475754826, %v346
      %v350 = vor.u32 %v348, %v349
      %v351 = vshll.u32 2475754826, %v345
      %v352 = vshrl.u32 2131351028, %v346
      %v353 = vor.u32 %v351, %v352
      %v354 = vshll.u32 2131351028, %v345
      %v355 = vshrl.u32 2102212464, %v346
      %v356 = vor.u32 %v354, %v355
      %v357 = vshll.u32 2102212464, %v345
      %v358 = vshrl.u32 920167782, %v346
      %v359 = vor.u32 %v357, %v358
      %v360 = vshll.u32 920167782, %v345
      %v361 = vshrl.u32 1326507024, %v346
      %v362 = vor.u32 %v360, %v361
      %vm363 = vcmp.lt.s32.totalorder %v344, 1
      %vm364 = vcmp.lt.s32.totalorder %v344, 2
      %vm365 = vcmp.lt.s32.totalorder %v344, 3
      %vm366 = vcmp.lt.s32.totalorder %v344, 4
      %v367 = vsel %vm363, %v347, %v350
      %v368 = vsel %vm366, %v356, 2102212464
      %v369 = vsel %vm365, %v353, %v368
      %v370 = vsel %vm364, %v367, %v369
      %v371 = vsel %vm363, %v350, %v353
      %v372 = vsel %vm366, %v359, 920167782
      %v373 = vsel %vm365, %v356, %v372
      %v374 = vsel %vm364, %v371, %v373
      %v375 = vsel %vm363, %v353, %v356
      %v376 = vsel %vm366, %v362, 1326507024
      %v377 = vsel %vm365, %v359, %v376
      %v378 = vsel %vm364, %v375, %v377
      %v379 = vshll.u32 %v339, 8
      %v380 = vmul.u32.u64.compose %v379, %v378
      %v381 = vextract.low.u32 %v380
      %v382 = vextract.high.u32 %v380
      %v383 = vmul.u32.u64.compose %v379, %v374
      %v384 = vextract.low.u32 %v383
      %v385 = vextract.high.u32 %v383
      %v386 = vmul.u32 %v379, %v370
      %v387 = vadd.s32 %v382, %v384
      %vm388 = vc.u32 %v382, %v384
      %v389 = vadd.s32 %v385, 1
      %v390 = vsel %vm388, %v389, %v385
      %v391 = vadd.s32 %v386, %v390
      %v392 = vadd.s32 %v391, 536870912
      %v393 = vshrl.u32 %v392, 30
      %v394 = vshll.u32 %v393, 30
      %v395 = vsub.s32 %v391, %v394
      %vm396 = vcmp.lt.s32.totalorder %v395, 0
      %v397 = vsub.s32 0, %v395
      %v398 = vsel %vm396, %v397, %v395
      %v399 = vclz %v398
      %v400 = vsub.s32 %v399, 2
      %vm401 = vcmp.gt.s32.totalorder 0, %v400
      %v402 = vsel %vm401, 0, %v400
      %v403 = vsub.s32 32, %v402
      %v404 = vshll.u32 %v395, %v402
      %v405 = vshrl.u32 %v387, %v403
      %v406 = vor.u32 %v404, %v405
      %v407 = vsub.s32 4294967266, %v402
      %v408 = vadd.s32 %v407, 127
      %v409 = vshll.u32 %v408, 23
      %v410 = vor.u32 4788187, %v409
      %v411 = vand.u32 2147483647, %v410
      %v413 = vcvt.s32.f32 %v406
      %v414 = vmul.f32 %v413, %v411
      %v415 = vxor.u32 %v414, 2147483648
      %v416 = vsel %vm333, %v415, %v414
      %v417 = vsub.s32 4, %v393
      %v418 = vsel %vm333, %v417, %v393
      %v419 = vsel %vm332, %v328, %v416
      %v420 = vsel %vm332, 0, %v418
      %v421 = vcosq.f32.pop %v419
      %v422 = vsinq.f32.pop %v419
      %vm423 = vweird.f32 %v328
      %v424 = vand.u32 %v420, 3
      %vm425 = vcmp.lt.s32.totalorder %v424, 2
      %vm426 = vcmp.eq.s32.totalorder %v424, 0
      %v427 = vxor.u32 %v422, 2147483648
      %v428 = vsel %vm426, %v421, %v427
      %vm429 = vcmp.eq.s32.totalorder %v424, 2
      %v430 = vxor.u32 %v421, 2147483648
      %v431 = vsel %vm429, %v430, %v422
      %v432 = vsel %vm425, %v428, %v431
      %v433 = vsel %vm423, nan, %v432
      %v434 = vand.u32 2147483647, %v329
      %vm435 = vcmp.le.f32.partialorder %v434, 0.7853982
      %vm436 = vcmp.lt.s32.totalorder %v329, 0
      %v437 = vand.u32 %v329, 2139095040
      %v438 = vshrl.u32 %v437, 23
      %v439 = vsub.s32 %v438, 127
      %v440 = vand.u32 2147483647, %v329
      %v441 = vand.u32 %v440, 8388607
      %v442 = vor.u32 %v441, 8388608
      %v443 = vsub.s32 0, %v442
      %v444 = vadd.s32 %v439, 1
      %vm445 = vcmp.gt.s32.totalorder %v444, 0
      %v446 = vsel %vm445, %v444, 0
      %v447 = vshrl.u32 %v446, 5
      %v448 = vand.u32 %v446, 31
      %v449 = vsub.s32 32, %v448
      %v450 = vshrl.u32 683565275, %v449
      %v451 = vshll.u32 683565275, %v448
      %v452 = vshrl.u32 2475754826, %v449
      %v453 = vor.u32 %v451, %v452
      %v454 = vshll.u32 2475754826, %v448
      %v455 = vshrl.u32 2131351028, %v449
      %v456 = vor.u32 %v454, %v455
      %v457 = vshll.u32 2131351028, %v448
      %v458 = vshrl.u32 2102212464, %v449
      %v459 = vor.u32 %v457, %v458
      %v460 = vshll.u32 2102212464, %v448
      %v461 = vshrl.u32 920167782, %v449
      %v462 = vor.u32 %v460, %v461
      %v463 = vshll.u32 920167782, %v448
      %v464 = vshrl.u32 1326507024, %v449
      %v465 = vor.u32 %v463, %v464
      %vm466 = vcmp.lt.s32.totalorder %v447, 1
      %vm467 = vcmp.lt.s32.totalorder %v447, 2
      %vm468 = vcmp.lt.s32.totalorder %v447, 3
      %vm469 = vcmp.lt.s32.totalorder %v447, 4
      %v470 = vsel %vm466, %v450, %v453
      %v471 = vsel %vm469, %v459, 2102212464
      %v472 = vsel %vm468, %v456, %v471
      %v473 = vsel %vm467, %v470, %v472
      %v474 = vsel %vm466, %v453, %v456
      %v475 = vsel %vm469, %v462, 920167782
      %v476 = vsel %vm468, %v459, %v475
      %v477 = vsel %vm467, %v474, %v476
      %v478 = vsel %vm466, %v456, %v459
      %v479 = vsel %vm469, %v465, 1326507024
      %v480 = vsel %vm468, %v462, %v479
      %v481 = vsel %vm467, %v478, %v480
      %v482 = vshll.u32 %v442, 8
      %v483 = vmul.u32.u64.compose %v482, %v481
      %v484 = vextract.low.u32 %v483
      %v485 = vextract.high.u32 %v483
      %v486 = vmul.u32.u64.compose %v482, %v477
      %v487 = vextract.low.u32 %v486
      %v488 = vextract.high.u32 %v486
      %v489 = vmul.u32 %v482, %v473
      %v490 = vadd.s32 %v485, %v487
      %vm491 = vc.u32 %v485, %v487
      %v492 = vadd.s32 %v488, 1
      %v493 = vsel %vm491, %v492, %v488
      %v494 = vadd.s32 %v489, %v493
      %v495 = vadd.s32 %v494, 536870912
      %v496 = vshrl.u32 %v495, 30
      %v497 = vshll.u32 %v496, 30
      %v498 = vsub.s32 %v494, %v497
      %vm499 = vcmp.lt.s32.totalorder %v498, 0
      %v500 = vsub.s32 0, %v498
      %v501 = vsel %vm499, %v500, %v498
      %v502 = vclz %v501
      %v503 = vsub.s32 %v502, 2
      %vm504 = vcmp.gt.s32.totalorder 0, %v503
      %v505 = vsel %vm504, 0, %v503
      %v506 = vsub.s32 32, %v505
      %v507 = vshll.u32 %v498, %v505
      %v508 = vshrl.u32 %v490, %v506
      %v509 = vor.u32 %v507, %v508
      %v510 = vsub.s32 4294967266, %v505
      %v511 = vadd.s32 %v510, 127
      %v512 = vshll.u32 %v511, 23
      %v513 = vor.u32 4788187, %v512
      %v514 = vand.u32 2147483647, %v513
      %v516 = vcvt.s32.f32 %v509
      %v517 = vmul.f32 %v516, %v514
      %v518 = vxor.u32 %v517, 2147483648
      %v519 = vsel %vm436, %v518, %v517
      %v520 = vsub.s32 4, %v496
      %v521 = vsel %vm436, %v520, %v496
      %v522 = vsel %vm435, %v329, %v519
      %v523 = vsel %vm435, 0, %v521
      %v524 = vcosq.f32.pop %v522
      %v525 = vsinq.f32.pop %v522
      %vm526 = vweird.f32 %v329
      %v527 = vand.u32 %v523, 3
      %vm528 = vcmp.lt.s32.totalorder %v527, 2
      %vm529 = vcmp.eq.s32.totalorder %v527, 0
      %v530 = vxor.u32 %v525, 2147483648
      %v531 = vsel %vm529, %v524, %v530
      %vm532 = vcmp.eq.s32.totalorder %v527, 2
      %v533 = vxor.u32 %v524, 2147483648
      %v534 = vsel %vm532, %v533, %v525
      %v535 = vsel %vm528, %v531, %v534
      %v536 = vsel %vm526, nan, %v535
      %v537 = vand.u32 2147483647, %v330
      %vm538 = vcmp.le.f32.partialorder %v537, 0.7853982
      %vm539 = vcmp.lt.s32.totalorder %v330, 0
      %v540 = vand.u32 %v330, 2139095040
      %v541 = vshrl.u32 %v540, 23
      %v542 = vsub.s32 %v541, 127
      %v543 = vand.u32 2147483647, %v330
      %v544 = vand.u32 %v543, 8388607
      %v545 = vor.u32 %v544, 8388608
      %v546 = vsub.s32 0, %v545
      %v547 = vadd.s32 %v542, 1
      %vm548 = vcmp.gt.s32.totalorder %v547, 0
      %v549 = vsel %vm548, %v547, 0
      %v550 = vshrl.u32 %v549, 5
      %v551 = vand.u32 %v549, 31
      %v552 = vsub.s32 32, %v551
      %v553 = vshrl.u32 683565275, %v552
      %v554 = vshll.u32 683565275, %v551
      %v555 = vshrl.u32 2475754826, %v552
      %v556 = vor.u32 %v554, %v555
      %v557 = vshll.u32 2475754826, %v551
      %v558 = vshrl.u32 2131351028, %v552
      %v559 = vor.u32 %v557, %v558
      %v560 = vshll.u32 2131351028, %v551
      %v561 = vshrl.u32 2102212464, %v552
      %v562 = vor.u32 %v560, %v561
      %v563 = vshll.u32 2102212464, %v551
      %v564 = vshrl.u32 920167782, %v552
      %v565 = vor.u32 %v563, %v564
      %v566 = vshll.u32 920167782, %v551
      %v567 = vshrl.u32 1326507024, %v552
      %v568 = vor.u32 %v566, %v567
      %vm569 = vcmp.lt.s32.totalorder %v550, 1
      %vm570 = vcmp.lt.s32.totalorder %v550, 2
      %vm571 = vcmp.lt.s32.totalorder %v550, 3
      %vm572 = vcmp.lt.s32.totalorder %v550, 4
      %v573 = vsel %vm569, %v553, %v556
      %v574 = vsel %vm572, %v562, 2102212464
      %v575 = vsel %vm571, %v559, %v574
      %v576 = vsel %vm570, %v573, %v575
      %v577 = vsel %vm569, %v556, %v559
      %v578 = vsel %vm572, %v565, 920167782
      %v579 = vsel %vm571, %v562, %v578
      %v580 = vsel %vm570, %v577, %v579
      %v581 = vsel %vm569, %v559, %v562
      %v582 = vsel %vm572, %v568, 1326507024
      %v583 = vsel %vm571, %v565, %v582
      %v584 = vsel %vm570, %v581, %v583
      %v585 = vshll.u32 %v545, 8
      %v586 = vmul.u32.u64.compose %v585, %v584
      %v587 = vextract.low.u32 %v586
      %v588 = vextract.high.u32 %v586
      %v589 = vmul.u32.u64.compose %v585, %v580
      %v590 = vextract.low.u32 %v589
      %v591 = vextract.high.u32 %v589
      %v592 = vmul.u32 %v585, %v576
      %v593 = vadd.s32 %v588, %v590
      %vm594 = vc.u32 %v588, %v590
      %v595 = vadd.s32 %v591, 1
      %v596 = vsel %vm594, %v595, %v591
      %v597 = vadd.s32 %v592, %v596
      %v598 = vadd.s32 %v597, 536870912
      %v599 = vshrl.u32 %v598, 30
      %v600 = vshll.u32 %v599, 30
      %v601 = vsub.s32 %v597, %v600
      %vm602 = vcmp.lt.s32.totalorder %v601, 0
      %v603 = vsub.s32 0, %v601
      %v604 = vsel %vm602, %v603, %v601
      %v605 = vclz %v604
      %v606 = vsub.s32 %v605, 2
      %vm607 = vcmp.gt.s32.totalorder 0, %v606
      %v608 = vsel %vm607, 0, %v606
      %v609 = vsub.s32 32, %v608
      %v610 = vshll.u32 %v601, %v608
      %v611 = vshrl.u32 %v593, %v609
      %v612 = vor.u32 %v610, %v611
      %v613 = vsub.s32 4294967266, %v608
      %v614 = vadd.s32 %v613, 127
      %v615 = vshll.u32 %v614, 23
      %v616 = vor.u32 4788187, %v615
      %v617 = vand.u32 2147483647, %v616
      %v619 = vcvt.s32.f32 %v612
      %v620 = vmul.f32 %v619, %v617
      %v621 = vxor.u32 %v620, 2147483648
      %v622 = vsel %vm539, %v621, %v620
      %v623 = vsub.s32 4, %v599
      %v624 = vsel %vm539, %v623, %v599
      %v625 = vsel %vm538, %v330, %v622
      %v626 = vsel %vm538, 0, %v624
      %v627 = vcosq.f32.pop %v625
      %v628 = vsinq.f32.pop %v625
      %vm629 = vweird.f32 %v330
      %v630 = vand.u32 %v626, 3
      %vm631 = vcmp.lt.s32.totalorder %v630, 2
      %vm632 = vcmp.eq.s32.totalorder %v630, 0
      %v633 = vxor.u32 %v628, 2147483648
      %v634 = vsel %vm632, %v627, %v633
      %vm635 = vcmp.eq.s32.totalorder %v630, 2
      %v636 = vxor.u32 %v627, 2147483648
      %v637 = vsel %vm635, %v636, %v628
      %v638 = vsel %vm631, %v634, %v637
      %v639 = vsel %vm629, nan, %v638
      %v640 = vmul.f32 %v325, %v433
      %v641 = vmul.f32 %v326, %v536
      %v642 = vmul.f32 %v327, %v639
      %v643 = vpack.c.bf16 %v641, %v640
      %v644 = vpack.c.bf16 %v642, %v642
      %v645 = vand.u32 2147483647, %v328
      %vm646 = vcmp.le.f32.partialorder %v645, 0.7853982
      %vm647 = vcmp.lt.s32.totalorder %v328, 0
      %v648 = vand.u32 %v328, 2139095040
      %v649 = vshrl.u32 %v648, 23
      %v650 = vsub.s32 %v649, 127
      %v651 = vand.u32 2147483647, %v328
      %v652 = vand.u32 %v651, 8388607
      %v653 = vor.u32 %v652, 8388608
      %v654 = vsub.s32 0, %v653
      %v655 = vadd.s32 %v650, 1
      %vm656 = vcmp.gt.s32.totalorder %v655, 0
      %v657 = vsel %vm656, %v655, 0
      %v658 = vshrl.u32 %v657, 5
      %v659 = vand.u32 %v657, 31
      %v660 = vsub.s32 32, %v659
      %v661 = vshrl.u32 683565275, %v660
      %v662 = vshll.u32 683565275, %v659
      %v663 = vshrl.u32 2475754826, %v660
      %v664 = vor.u32 %v662, %v663
      %v665 = vshll.u32 2475754826, %v659
      %v666 = vshrl.u32 2131351028, %v660
      %v667 = vor.u32 %v665, %v666
      %v668 = vshll.u32 2131351028, %v659
      %v669 = vshrl.u32 2102212464, %v660
      %v670 = vor.u32 %v668, %v669
      %v671 = vshll.u32 2102212464, %v659
      %v672 = vshrl.u32 920167782, %v660
      %v673 = vor.u32 %v671, %v672
      %v674 = vshll.u32 920167782, %v659
      %v675 = vshrl.u32 1326507024, %v660
      %v676 = vor.u32 %v674, %v675
      %vm677 = vcmp.lt.s32.totalorder %v658, 1
      %vm678 = vcmp.lt.s32.totalorder %v658, 2
      %vm679 = vcmp.lt.s32.totalorder %v658, 3
      %vm680 = vcmp.lt.s32.totalorder %v658, 4
      %v681 = vsel %vm677, %v661, %v664
      %v682 = vsel %vm680, %v670, 2102212464
      %v683 = vsel %vm679, %v667, %v682
      %v684 = vsel %vm678, %v681, %v683
      %v685 = vsel %vm677, %v664, %v667
      %v686 = vsel %vm680, %v673, 920167782
      %v687 = vsel %vm679, %v670, %v686
      %v688 = vsel %vm678, %v685, %v687
      %v689 = vsel %vm677, %v667, %v670
      %v690 = vsel %vm680, %v676, 1326507024
      %v691 = vsel %vm679, %v673, %v690
      %v692 = vsel %vm678, %v689, %v691
      %v693 = vshll.u32 %v653, 8
      %v694 = vmul.u32.u64.compose %v693, %v692
      %v695 = vextract.low.u32 %v694
      %v696 = vextract.high.u32 %v694
      %v697 = vmul.u32.u64.compose %v693, %v688
      %v698 = vextract.low.u32 %v697
      %v699 = vextract.high.u32 %v697
      %v700 = vmul.u32 %v693, %v684
      %v701 = vadd.s32 %v696, %v698
      %vm702 = vc.u32 %v696, %v698
      %v703 = vadd.s32 %v699, 1
      %v704 = vsel %vm702, %v703, %v699
      %v705 = vadd.s32 %v700, %v704
      %v706 = vadd.s32 %v705, 536870912
      %v707 = vshrl.u32 %v706, 30
      %v708 = vshll.u32 %v707, 30
      %v709 = vsub.s32 %v705, %v708
      %vm710 = vcmp.lt.s32.totalorder %v709, 0
      %v711 = vsub.s32 0, %v709
      %v712 = vsel %vm710, %v711, %v709
      %v713 = vclz %v712
      %v714 = vsub.s32 %v713, 2
      %vm715 = vcmp.gt.s32.totalorder 0, %v714
      %v716 = vsel %vm715, 0, %v714
      %v717 = vsub.s32 32, %v716
      %v718 = vshll.u32 %v709, %v716
      %v719 = vshrl.u32 %v701, %v717
      %v720 = vor.u32 %v718, %v719
      %v721 = vsub.s32 4294967266, %v716
      %v722 = vadd.s32 %v721, 127
      %v723 = vshll.u32 %v722, 23
      %v724 = vor.u32 4788187, %v723
      %v725 = vand.u32 2147483647, %v724
      %v727 = vcvt.s32.f32 %v720
      %v728 = vmul.f32 %v727, %v725
      %v729 = vxor.u32 %v728, 2147483648
      %v730 = vsel %vm647, %v729, %v728
      %v731 = vsub.s32 4, %v707
      %v732 = vsel %vm647, %v731, %v707
      %v733 = vsel %vm646, %v328, %v730
      %v734 = vsel %vm646, 0, %v732
      %v735 = vcosq.f32.pop %v733
      %v736 = vsinq.f32.pop %v733
      %vm737 = vweird.f32 %v328
      %v738 = vadd.s32 %v734, 3
      %v739 = vand.u32 %v738, 3
      %vm740 = vcmp.lt.s32.totalorder %v739, 2
      %vm741 = vcmp.eq.s32.totalorder %v739, 0
      %v742 = vxor.u32 %v736, 2147483648
      %v743 = vsel %vm741, %v735, %v742
      %vm744 = vcmp.eq.s32.totalorder %v739, 2
      %v745 = vxor.u32 %v735, 2147483648
      %v746 = vsel %vm744, %v745, %v736
      %v747 = vsel %vm740, %v743, %v746
      %v748 = vsel %vm737, nan, %v747
      %v749 = vand.u32 2147483647, %v329
      %vm750 = vcmp.le.f32.partialorder %v749, 0.7853982
      %vm751 = vcmp.lt.s32.totalorder %v329, 0
      %v752 = vand.u32 %v329, 2139095040
      %v753 = vshrl.u32 %v752, 23
      %v754 = vsub.s32 %v753, 127
      %v755 = vand.u32 2147483647, %v329
      %v756 = vand.u32 %v755, 8388607
      %v757 = vor.u32 %v756, 8388608
      %v758 = vsub.s32 0, %v757
      %v759 = vadd.s32 %v754, 1
      %vm760 = vcmp.gt.s32.totalorder %v759, 0
      %v761 = vsel %vm760, %v759, 0
      %v762 = vshrl.u32 %v761, 5
      %v763 = vand.u32 %v761, 31
      %v764 = vsub.s32 32, %v763
      %v765 = vshrl.u32 683565275, %v764
      %v766 = vshll.u32 683565275, %v763
      %v767 = vshrl.u32 2475754826, %v764
      %v768 = vor.u32 %v766, %v767
      %v769 = vshll.u32 2475754826, %v763
      %v770 = vshrl.u32 2131351028, %v764
      %v771 = vor.u32 %v769, %v770
      %v772 = vshll.u32 2131351028, %v763
      %v773 = vshrl.u32 2102212464, %v764
      %v774 = vor.u32 %v772, %v773
      %v775 = vshll.u32 2102212464, %v763
      %v776 = vshrl.u32 920167782, %v764
      %v777 = vor.u32 %v775, %v776
      %v778 = vshll.u32 920167782, %v763
      %v779 = vshrl.u32 1326507024, %v764
      %v780 = vor.u32 %v778, %v779
      %vm781 = vcmp.lt.s32.totalorder %v762, 1
      %vm782 = vcmp.lt.s32.totalorder %v762, 2
      %vm783 = vcmp.lt.s32.totalorder %v762, 3
      %vm784 = vcmp.lt.s32.totalorder %v762, 4
      %v785 = vsel %vm781, %v765, %v768
      %v786 = vsel %vm784, %v774, 2102212464
      %v787 = vsel %vm783, %v771, %v786
      %v788 = vsel %vm782, %v785, %v787
      %v789 = vsel %vm781, %v768, %v771
      %v790 = vsel %vm784, %v777, 920167782
      %v791 = vsel %vm783, %v774, %v790
      %v792 = vsel %vm782, %v789, %v791
      %v793 = vsel %vm781, %v771, %v774
      %v794 = vsel %vm784, %v780, 1326507024
      %v795 = vsel %vm783, %v777, %v794
      %v796 = vsel %vm782, %v793, %v795
      %v797 = vshll.u32 %v757, 8
      %v798 = vmul.u32.u64.compose %v797, %v796
      %v799 = vextract.low.u32 %v798
      %v800 = vextract.high.u32 %v798
      %v801 = vmul.u32.u64.compose %v797, %v792
      %v802 = vextract.low.u32 %v801
      %v803 = vextract.high.u32 %v801
      %v804 = vmul.u32 %v797, %v788
      %v805 = vadd.s32 %v800, %v802
      %vm806 = vc.u32 %v800, %v802
      %v807 = vadd.s32 %v803, 1
      %v808 = vsel %vm806, %v807, %v803
      %v809 = vadd.s32 %v804, %v808
      %v810 = vadd.s32 %v809, 536870912
      %v811 = vshrl.u32 %v810, 30
      %v812 = vshll.u32 %v811, 30
      %v813 = vsub.s32 %v809, %v812
      %vm814 = vcmp.lt.s32.totalorder %v813, 0
      %v815 = vsub.s32 0, %v813
      %v816 = vsel %vm814, %v815, %v813
      %v817 = vclz %v816
      %v818 = vsub.s32 %v817, 2
      %vm819 = vcmp.gt.s32.totalorder 0, %v818
      %v820 = vsel %vm819, 0, %v818
      %v821 = vsub.s32 32, %v820
      %v822 = vshll.u32 %v813, %v820
      %v823 = vshrl.u32 %v805, %v821
      %v824 = vor.u32 %v822, %v823
      %v825 = vsub.s32 4294967266, %v820
      %v826 = vadd.s32 %v825, 127
      %v827 = vshll.u32 %v826, 23
      %v828 = vor.u32 4788187, %v827
      %v829 = vand.u32 2147483647, %v828
      %v831 = vcvt.s32.f32 %v824
      %v832 = vmul.f32 %v831, %v829
      %v833 = vxor.u32 %v832, 2147483648
      %v834 = vsel %vm751, %v833, %v832
      %v835 = vsub.s32 4, %v811
      %v836 = vsel %vm751, %v835, %v811
      %v837 = vsel %vm750, %v329, %v834
      %v838 = vsel %vm750, 0, %v836
      %v839 = vcosq.f32.pop %v837
      %v840 = vsinq.f32.pop %v837
      %vm841 = vweird.f32 %v329
      %v842 = vadd.s32 %v838, 3
      %v843 = vand.u32 %v842, 3
      %vm844 = vcmp.lt.s32.totalorder %v843, 2
      %vm845 = vcmp.eq.s32.totalorder %v843, 0
      %v846 = vxor.u32 %v840, 2147483648
      %v847 = vsel %vm845, %v839, %v846
      %vm848 = vcmp.eq.s32.totalorder %v843, 2
      %v849 = vxor.u32 %v839, 2147483648
      %v850 = vsel %vm848, %v849, %v840
      %v851 = vsel %vm844, %v847, %v850
      %v852 = vsel %vm841, nan, %v851
      %v853 = vand.u32 2147483647, %v330
      %vm854 = vcmp.le.f32.partialorder %v853, 0.7853982
      %vm855 = vcmp.lt.s32.totalorder %v330, 0
      %v856 = vand.u32 %v330, 2139095040
      %v857 = vshrl.u32 %v856, 23
      %v858 = vsub.s32 %v857, 127
      %v859 = vand.u32 2147483647, %v330
      %v860 = vand.u32 %v859, 8388607
      %v861 = vor.u32 %v860, 8388608
      %v862 = vsub.s32 0, %v861
      %v863 = vadd.s32 %v858, 1
      %vm864 = vcmp.gt.s32.totalorder %v863, 0
      %v865 = vsel %vm864, %v863, 0
      %v866 = vshrl.u32 %v865, 5
      %v867 = vand.u32 %v865, 31
      %v868 = vsub.s32 32, %v867
      %v869 = vshrl.u32 683565275, %v868
      %v870 = vshll.u32 683565275, %v867
      %v871 = vshrl.u32 2475754826, %v868
      %v872 = vor.u32 %v870, %v871
      %v873 = vshll.u32 2475754826, %v867
      %v874 = vshrl.u32 2131351028, %v868
      %v875 = vor.u32 %v873, %v874
      %v876 = vshll.u32 2131351028, %v867
      %v877 = vshrl.u32 2102212464, %v868
      %v878 = vor.u32 %v876, %v877
      %v879 = vshll.u32 2102212464, %v867
      %v880 = vshrl.u32 920167782, %v868
      %v881 = vor.u32 %v879, %v880
      %v882 = vshll.u32 920167782, %v867
      %v883 = vshrl.u32 1326507024, %v868
      %v884 = vor.u32 %v882, %v883
      %vm885 = vcmp.lt.s32.totalorder %v866, 1
      %vm886 = vcmp.lt.s32.totalorder %v866, 2
      %vm887 = vcmp.lt.s32.totalorder %v866, 3
      %vm888 = vcmp.lt.s32.totalorder %v866, 4
      %v889 = vsel %vm885, %v869, %v872
      %v890 = vsel %vm888, %v878, 2102212464
      %v891 = vsel %vm887, %v875, %v890
      %v892 = vsel %vm886, %v889, %v891
      %v893 = vsel %vm885, %v872, %v875
      %v894 = vsel %vm888, %v881, 920167782
      %v895 = vsel %vm887, %v878, %v894
      %v896 = vsel %vm886, %v893, %v895
      %v897 = vsel %vm885, %v875, %v878
      %v898 = vsel %vm888, %v884, 1326507024
      %v899 = vsel %vm887, %v881, %v898
      %v900 = vsel %vm886, %v897, %v899
      %v901 = vshll.u32 %v861, 8
      %v902 = vmul.u32.u64.compose %v901, %v900
      %v903 = vextract.low.u32 %v902
      %v904 = vextract.high.u32 %v902
      %v905 = vmul.u32.u64.compose %v901, %v896
      %v906 = vextract.low.u32 %v905
      %v907 = vextract.high.u32 %v905
      %v908 = vmul.u32 %v901, %v892
      %v909 = vadd.s32 %v904, %v906
      %vm910 = vc.u32 %v904, %v906
      %v911 = vadd.s32 %v907, 1
      %v912 = vsel %vm910, %v911, %v907
      %v913 = vadd.s32 %v908, %v912
      %v914 = vadd.s32 %v913, 536870912
      %v915 = vshrl.u32 %v914, 30
      %v916 = vshll.u32 %v915, 30
      %v917 = vsub.s32 %v913, %v916
      %vm918 = vcmp.lt.s32.totalorder %v917, 0
      %v919 = vsub.s32 0, %v917
      %v920 = vsel %vm918, %v919, %v917
      %v921 = vclz %v920
      %v922 = vsub.s32 %v921, 2
      %vm923 = vcmp.gt.s32.totalorder 0, %v922
      %v924 = vsel %vm923, 0, %v922
      %v925 = vsub.s32 32, %v924
      %v926 = vshll.u32 %v917, %v924
      %v927 = vshrl.u32 %v909, %v925
      %v928 = vor.u32 %v926, %v927
      %v929 = vsub.s32 4294967266, %v924
      %v930 = vadd.s32 %v929, 127
      %v931 = vshll.u32 %v930, 23
      %v932 = vor.u32 4788187, %v931
      %v933 = vand.u32 2147483647, %v932
      %v935 = vcvt.s32.f32 %v928
      %v936 = vmul.f32 %v935, %v933
      %v937 = vxor.u32 %v936, 2147483648
      %v938 = vsel %vm855, %v937, %v936
      %v939 = vsub.s32 4, %v915
      %v940 = vsel %vm855, %v939, %v915
      %v941 = vsel %vm854, %v330, %v938
      %v942 = vsel %vm854, 0, %v940
      %v943 = vcosq.f32.pop %v941
      %v944 = vsinq.f32.pop %v941
      %vm945 = vweird.f32 %v330
      %v946 = vadd.s32 %v942, 3
      %v947 = vand.u32 %v946, 3
      %vm948 = vcmp.lt.s32.totalorder %v947, 2
      %vm949 = vcmp.eq.s32.totalorder %v947, 0
      %v950 = vxor.u32 %v944, 2147483648
      %v951 = vsel %vm949, %v943, %v950
      %vm952 = vcmp.eq.s32.totalorder %v947, 2
      %v953 = vxor.u32 %v943, 2147483648
      %v954 = vsel %vm952, %v953, %v944
      %v955 = vsel %vm948, %v951, %v954
      %v956 = vsel %vm945, nan, %v955
      %v957 = vmul.f32 %v325, %v748
      %v958 = vmul.f32 %v326, %v852
      %v959 = vmul.f32 %v327, %v956
      %v960 = vpack.c.bf16 %v958, %v957
      %v961 = vpack.c.bf16 %v959, %v959
      %v962 = vld [vmem:[%s4] sm:$0xf]
      %v963 = vld [vmem:[%s4 + $0x4] sm:$0xf]
      %v964 = vld [vmem:[%s4 + $0x8] sm:$0xf]
      %v965 = vld [vmem:[%s4 + $0xc] sm:$0xf]
      %v966 = vld [vmem:[%s4 + $0x10] sm:$0xf]
      %v967 = vld [vmem:[%s4 + $0x14] sm:$0xf]
      %v968 = vld [vmem:[%s4 + $0x18] sm:$0xf]
      %v969 = vld [vmem:[%s4 + $0x1c] sm:$0xf]
      %v970 = vld [vmem:[%s4 + $0x20] sm:$0xf]
      %v971 = vld [vmem:[%s4 + $0x24] sm:$0xf]
      %v972 = vld [vmem:[%s4 + $0x28] sm:$0xf]
      %v973 = vld [vmem:[%s4 + $0x2c] sm:$0xf]
      %v974 = vld [vmem:[%s4 + $0x30] sm:$0xf]
      %v975 = vld [vmem:[%s4 + $0x34] sm:$0xf]
      %v976 = vld [vmem:[%s4 + $0x38] sm:$0xf]
      %v977 = vld [vmem:[%s4 + $0x3c] sm:$0xf]
      %v978 = vld [vmem:[%s4 + $0x40] sm:$0xf]
      %v979 = vld [vmem:[%s4 + $0x44] sm:$0xf]
      %v980 = vld [vmem:[%s4 + $0x48] sm:$0xf]
      %v981 = vld [vmem:[%s4 + $0x4c] sm:$0xf]
      %v982 = vld [vmem:[%s4 + $0x50] sm:$0xf]
      %v983 = vld [vmem:[%s4 + $0x54] sm:$0xf]
      %v984 = vld [vmem:[%s4 + $0x58] sm:$0xf]
      %v985 = vld [vmem:[%s4 + $0x5c] sm:$0xf]
      %v986 = vld [vmem:[%s4 + $0x60] sm:$0xf]
      %v987 = vld [vmem:[%s4 + $0x64] sm:$0xf]
      %v988 = vld [vmem:[%s4 + $0x68] sm:$0xf]
      %v989 = vld [vmem:[%s4 + $0x6c] sm:$0xf]
      %v990 = vld [vmem:[%s4 + $0x70] sm:$0xf]
      %v991 = vld [vmem:[%s4 + $0x74] sm:$0xf]
      %v992 = vld [vmem:[%s4 + $0x78] sm:$0xf]
      %v993 = vld [vmem:[%s4 + $0x7c] sm:$0xf]
      %v1026 = vunpack.c.l.b16 %v962
      %v1027 = vunpack.c.l.b16 %v963
      %v1028 = vunpack.c.l.b16 %v964
      %v1029 = vunpack.c.l.b16 %v965
      %v1030 = vunpack.c.l.b16 %v966
      %v1031 = vunpack.c.l.b16 %v967
      %v1032 = vunpack.c.l.b16 %v968
      %v1033 = vunpack.c.l.b16 %v969
      %v1034 = vunpack.c.l.b16 %v970
      %v1035 = vunpack.c.l.b16 %v971
      %v1036 = vunpack.c.l.b16 %v972
      %v1037 = vunpack.c.l.b16 %v973
      %v1038 = vunpack.c.l.b16 %v974
      %v1039 = vunpack.c.l.b16 %v975
      %v1040 = vunpack.c.l.b16 %v976
      %v1041 = vunpack.c.l.b16 %v977
      %v1042 = vunpack.c.l.b16 %v978
      %v1043 = vunpack.c.l.b16 %v979
      %v1044 = vunpack.c.l.b16 %v980
      %v1045 = vunpack.c.l.b16 %v981
      %v1046 = vunpack.c.l.b16 %v982
      %v1047 = vunpack.c.l.b16 %v983
      %v1048 = vunpack.c.l.b16 %v984
      %v1049 = vunpack.c.l.b16 %v985
      %v1050 = vunpack.c.l.b16 %v986
      %v1051 = vunpack.c.l.b16 %v987
      %v1052 = vunpack.c.l.b16 %v988
      %v1053 = vunpack.c.l.b16 %v989
      %v1054 = vunpack.c.l.b16 %v990
      %v1055 = vunpack.c.l.b16 %v991
      %v1056 = vunpack.c.l.b16 %v992
      %v1057 = vunpack.c.l.b16 %v993
      %v1058 = vpack.c.b16 %v1027, %v1026
      %v1059 = vpack.c.b16 %v1029, %v1028
      %v1060 = vpack.c.b16 %v1031, %v1030
      %v1061 = vpack.c.b16 %v1033, %v1032
      %v1062 = vpack.c.b16 %v1035, %v1034
      %v1063 = vpack.c.b16 %v1037, %v1036
      %v1064 = vpack.c.b16 %v1039, %v1038
      %v1065 = vpack.c.b16 %v1041, %v1040
      %v1066 = vpack.c.b16 %v1043, %v1042
      %v1067 = vpack.c.b16 %v1045, %v1044
      %v1068 = vpack.c.b16 %v1047, %v1046
      %v1069 = vpack.c.b16 %v1049, %v1048
      %v1070 = vpack.c.b16 %v1051, %v1050
      %v1071 = vpack.c.b16 %v1053, %v1052
      %v1072 = vpack.c.b16 %v1055, %v1054
      %v1073 = vpack.c.b16 %v1057, %v1056
      %1090 = vmatprep.subr.bf16.mxu0 0
      %1091 = vmatpush1.bf16.msra.mxu0 %v1065
      %1092 = vmatprep.subr.bf16.mxu0 0
      %1093 = vmatpush1.bf16.msra.mxu0 %v1064
      %1094 = vmatprep.subr.bf16.mxu0 0
      %1095 = vmatpush1.bf16.msra.mxu0 %v1063
      %1096 = vmatprep.subr.bf16.mxu0 0
      %1097 = vmatpush1.bf16.msra.mxu0 %v1062
      %1098 = vmatprep.subr.bf16.mxu0 0
      %1099 = vmatpush1.bf16.msra.mxu0 %v1061
      %1100 = vmatprep.subr.bf16.mxu0 0
      %1101 = vmatpush1.bf16.msra.mxu0 %v1060
      %1102 = vmatprep.subr.bf16.mxu0 0
      %1103 = vmatpush1.bf16.msra.mxu0 %v1059
      %1104 = vmatprep.subr.bf16.mxu0 0
      %1105 = vmatpush1.bf16.msra.mxu0 %v1058
      %1106 = vmatprep.subr.bf16.mxu0 0
      %1107 = vmatpush2.bf16.msra.mxu0 %v1073
      %1108 = vmatprep.subr.bf16.mxu0 0
      %1109 = vmatpush2.bf16.msra.mxu0 %v1072
      %1110 = vmatprep.subr.bf16.mxu0 0
      %1111 = vmatpush2.bf16.msra.mxu0 %v1071
      %1112 = vmatprep.subr.bf16.mxu0 0
      %1113 = vmatpush2.bf16.msra.mxu0 %v1070
      %1114 = vmatprep.subr.bf16.mxu0 0
      %1115 = vmatpush2.bf16.msra.mxu0 %v1069
      %1116 = vmatprep.subr.bf16.mxu0 0
      %1117 = vmatpush2.bf16.msra.mxu0 %v1068
      %1118 = vmatprep.subr.bf16.mxu0 0
      %1119 = vmatpush2.bf16.msra.mxu0 %v1067
      %1120 = vmatprep.subr.bf16.mxu0 0
      %1121 = vmatpush2.bf16.msra.mxu0 %v1066
      %1122 = vmatprep.mubr.bf16.mxu0 %v960
      %1123 = vmatmul.mubr.bf16.gmra.mxu0 %v643
      %v1124 = vpop.f32.mrf.mxu0
      %v1125 = vadd.f32 0.0, %v1124
      %v1126 = vpop.f32.mrf.mxu0
      %v1127 = vpop.f32.mrf.mxu0
      %v1128 = vadd.f32 0.0, %v1127
      %v1129 = vpop.f32.mrf.mxu0
      %1130 = vmatprep.mubr.bf16.mxu0 %v961
      %1131 = vmatmul.mubr.bf16.gmra.mxu0 %v644
      %v1132 = vpop.f32.mrf.mxu0
      %v1133 = vadd.f32 0.0, %v1132
      %v1134 = vpop.f32.mrf.mxu0
      %v1135 = vpop.f32.mrf.mxu0
      %v1136 = vpop.f32.mrf.mxu0
      %1137 = vdwg.mxu0
      %1138 = vst [vmem:[%s292] sm:$0xff] %v1125
      %1139 = vst [vmem:[%s292 + $0x8] sm:$0xff] %v1128
      %1140 = vst [vmem:[%s292 + $0x10] sm:$0xff] %v1133
      %s1141 = smul.u32 3, %s16
      %p1142 = scmp.lt.s32.totalorder %s1141, 11
      %s1143 = scalar_select %p1142, %s1141, 11
      %s1144 = smul.addr %s1143, 8
      %s1145 = scalar_lea.vmem %s5, %s1144
      // Predicated region
      $region41: #{_pitch_shift_core.4} parent=39 // pred_check
        %p1146 = pneg %p159
      $region42: #{_pitch_shift_core.4} parent=39 // pred_check_branch
        %1148 = sbr.rel (%p1146) target = $region44
      $region43: #{_pitch_shift_core.4} parent=39 // pred_region
        %s1149 = smul.u32 3, %s16
      $region44: #{_pitch_shift_core.4} parent=39 // pred_fallthru
        _
    $region40: #{_pitch_shift_core.4} parent=5 // pred_fallthru
      _
    %p1150 = scmp.le.s32.totalorder 2, %s11
    // Predicated region
    $region45: #{_pitch_shift_core.4} parent=5 // pred_check
      %p1151 = pneg %p1150
    $region46: #{_pitch_shift_core.4} parent=5 // pred_check_branch
      %1153 = sbr.rel (%p1151) target = $region48
    $region47: #{_pitch_shift_core.4} parent=5 // pred_region
      %s1154 = ssub.s32 %s11, 2
      // Predicated region
      $region49: #{_pitch_shift_core.4} parent=47 // pred_check
        %p1155 = pneg %p165
      $region50: #{_pitch_shift_core.4} parent=47 // pred_check_branch
        %1157 = sbr.rel (%p1155) target = $region52
      $region51: #{_pitch_shift_core.4} parent=47 // pred_region
        %s1158 = smul.u32 3, %s17
        %p1159 = scmp.lt.s32.totalorder %s1158, 11
        %s1160 = scalar_select %p1159, %s1158, 11
        %s1161 = smul.addr %s1160, 8
        %s1162 = scalar_lea.vmem %s5, %s1161
      $region52: #{_pitch_shift_core.4} parent=47 // pred_fallthru
        _
    $region48: #{_pitch_shift_core.4} parent=5 // pred_fallthru
      _
  $region6: #{_pitch_shift_core.4} parent=0 // loop_footer
    %s15 = sadd.s32 1, %s11
  $region7: #{_pitch_shift_core.4} parent=0 // loop_footer_branch
    %10 = sbr.rel target = $region3
  $region8: #{_pitch_shift_core.4} parent=0 // loop_exit
    _

// kernel: _pitch_shift_core.5
$region0: #{_pitch_shift_core.5}
  #allocation0 [shape = 'u32[]', space=smem, size = 0x4, offset = 0x4, fixed_abs, tag = 'smem constant byte address 0x4 - core index']
  #allocation1 [shape = 'u32[144,128]{1,0:T(1,128)}', space=vmem, size = 0x12000, scoped, tag = 'internal scratch']
  %s0 = inlined_call_operand.vmem [shape: f32[2,1024], index: 0, kind: input, shape index: {}]
  %s1 = inlined_call_operand.vmem [shape: f32[2,1024], index: 1, kind: input, shape index: {}]
  %s2 = inlined_call_operand.vmem [shape: f32[1,1024], index: 2, kind: input, shape index: {}]
  %s3 = inlined_call_operand.vmem [shape: f32[1,1024], index: 3, kind: input, shape index: {}]
  %s4 = inlined_call_operand.hbm [shape: f32[2,1024], index: 4, kind: output, shape index: {}]
  %s5 = sld [smem:[#allocation0]]
  $region49: #{_pitch_shift_core.5} parent=0
    _
  %s7 = ssub.s32 1, %s5
  %s8 = scalar_select 0, %s7, %s5
  $region1: #{_pitch_shift_core.5} parent=0
    #allocation2 [shape = 'u8[4096]{0}', space=vmem, size = 0x1000, scoped, tag = 'output window, operand 0']
    #allocation3 [shape = 's32[2]{0}', space=sflag, size = 0x8, scoped, tag = 'scoped memory for _pitch_shift_core.5']
    %9 = vsyncpa [#allocation3], 0
    %s10 = scalar_lea.sflag [#allocation3], 1
    %11 = vsyncpa %s10, 0
    loop: start=0, step=1, limit=6
    $region2: #{_pitch_shift_core.5} parent=1 // loop_pre_header
      _
    $region3: #{_pitch_shift_core.5} parent=1 // loop_header
      %s13 = sphi 0, %s17
      %p14 = scmp.ge.s32.totalorder %s13, 6
      %s20 = sphi 0, %s32
      %s21 = sphi 0, %s28
      %s22 = sphi 0, %s20
      %s23 = sphi 0, %s21
      %s24 = sphi 0, %s22
      %s25 = sphi 0, %s23
      %s37 = sphi 0, %s39
      %s40 = sphi 0, %s37
      %s41 = sphi 0, %s40
      %s57 = sphi 0, %s41
      %s65 = sphi 0, %s67
      %s68 = sphi 0, %s65
      %s69 = sphi 0, %s68
      %s85 = sphi 0, %s69
      %s91 = sphi 0, %s93
      %s94 = sphi 0, %s91
      %s95 = sphi 0, %s94
      %s111 = sphi 0, %s95
      %s117 = sphi 0, %s119
      %s120 = sphi 0, %s117
      %s121 = sphi 0, %s120
      %s137 = sphi 0, %s121
      %s145 = sphi 0, %s147
      %s148 = sphi 0, %s145
      %s149 = sphi 0, %s148
      %s165 = sphi 0, %s149
    $region4: #{_pitch_shift_core.5} parent=1 // loop_header_branch
      %16 = sbr.rel (%p14) target = $region8
    $region5: #{_pitch_shift_core.5} parent=1 // loop_body
      %s18 = ssub.s32 %s13, 1
      %s19 = ssub.s32 %s13, 2
      %s26 = sadd.s32 1, %s21
      %p27 = scmp.ge.s32.totalorder %s26, 4
      %s28 = scalar_select %p27, 0, %s26
      %s29 = sadd.s32 1, %s20
      %s30 = scalar_select %p27, %s29, %s20
      %p31 = scmp.ge.s32.totalorder %s30, 1
      %s32 = scalar_select %p31, 0, %s30
      %s33 = ssub.s32 %s20, %s32
      %s34 = ssub.s32 %s21, %s28
      %s35 = sor.u32 %s33, %s34
      %p36 = scmp.eq.s32.totalorder %s35, 0
      %s38 = sadd.s32 %s37, 1
      %s39 = scalar_select %p36, %s37, %s38
      %p42 = pneg %p36
      %p43 = scmp.eq.s32.totalorder %s13, 3
      %p44 = por %p42, %p43
      %p45 = scmp.ne.s32.totalorder %s37, %s40
      %p46 = scmp.eq.s32.totalorder %s13, 0
      %p47 = por %p45, %p46
      %p48 = scmp.ne.s32.totalorder %s37, %s40
      %p49 = scmp.eq.s32.totalorder %s18, 3
      %p50 = por %p48, %p49
      %p51 = scmp.ne.s32.totalorder %s40, %s41
      %p52 = scmp.eq.s32.totalorder %s18, 0
      %p53 = por %p51, %p52
      %p54 = scmp.ne.s32.totalorder %s40, %s41
      %p55 = scmp.eq.s32.totalorder %s19, 3
      %p56 = por %p54, %p55
      %p58 = scmp.ne.s32.totalorder %s41, %s57
      %p59 = scmp.eq.s32.totalorder %s19, 0
      %p60 = por %p58, %p59
      %s61 = ssub.s32 %s20, %s32
      %s62 = ssub.s32 %s21, %s28
      %s63 = sor.u32 %s61, %s62
      %p64 = scmp.eq.s32.totalorder %s63, 0
      %s66 = sadd.s32 %s65, 1
      %s67 = scalar_select %p64, %s65, %s66
      %p70 = pneg %p64
      %p71 = scmp.eq.s32.totalorder %s13, 3
      %p72 = por %p70, %p71
      %p73 = scmp.ne.s32.totalorder %s65, %s68
      %p74 = scmp.eq.s32.totalorder %s13, 0
      %p75 = por %p73, %p74
      %p76 = scmp.ne.s32.totalorder %s65, %s68
      %p77 = scmp.eq.s32.totalorder %s18, 3
      %p78 = por %p76, %p77
      %p79 = scmp.ne.s32.totalorder %s68, %s69
      %p80 = scmp.eq.s32.totalorder %s18, 0
      %p81 = por %p79, %p80
      %p82 = scmp.ne.s32.totalorder %s68, %s69
      %p83 = scmp.eq.s32.totalorder %s19, 3
      %p84 = por %p82, %p83
      %p86 = scmp.ne.s32.totalorder %s69, %s85
      %p87 = scmp.eq.s32.totalorder %s19, 0
      %p88 = por %p86, %p87
      %s89 = ssub.s32 %s21, %s28
      %p90 = scmp.eq.s32.totalorder %s89, 0
      %s92 = sadd.s32 %s91, 1
      %s93 = scalar_select %p90, %s91, %s92
      %p96 = pneg %p90
      %p97 = scmp.eq.s32.totalorder %s13, 3
      %p98 = por %p96, %p97
      %p99 = scmp.ne.s32.totalorder %s91, %s94
      %p100 = scmp.eq.s32.totalorder %s13, 0
      %p101 = por %p99, %p100
      %p102 = scmp.ne.s32.totalorder %s91, %s94
      %p103 = scmp.eq.s32.totalorder %s18, 3
      %p104 = por %p102, %p103
      %p105 = scmp.ne.s32.totalorder %s94, %s95
      %p106 = scmp.eq.s32.totalorder %s18, 0
      %p107 = por %p105, %p106
      %p108 = scmp.ne.s32.totalorder %s94, %s95
      %p109 = scmp.eq.s32.totalorder %s19, 3
      %p110 = por %p108, %p109
      %p112 = scmp.ne.s32.totalorder %s95, %s111
      %p113 = scmp.eq.s32.totalorder %s19, 0
      %p114 = por %p112, %p113
      %s115 = ssub.s32 %s21, %s28
      %p116 = scmp.eq.s32.totalorder %s115, 0
      %s118 = sadd.s32 %s117, 1
      %s119 = scalar_select %p116, %s117, %s118
      %p122 = pneg %p116
      %p123 = scmp.eq.s32.totalorder %s13, 3
      %p124 = por %p122, %p123
      %p125 = scmp.ne.s32.totalorder %s117, %s120
      %p126 = scmp.eq.s32.totalorder %s13, 0
      %p127 = por %p125, %p126
      %p128 = scmp.ne.s32.totalorder %s117, %s120
      %p129 = scmp.eq.s32.totalorder %s18, 3
      %p130 = por %p128, %p129
      %p131 = scmp.ne.s32.totalorder %s120, %s121
      %p132 = scmp.eq.s32.totalorder %s18, 0
      %p133 = por %p131, %p132
      %p134 = scmp.ne.s32.totalorder %s120, %s121
      %p135 = scmp.eq.s32.totalorder %s19, 3
      %p136 = por %p134, %p135
      %p138 = scmp.ne.s32.totalorder %s121, %s137
      %p139 = scmp.eq.s32.totalorder %s19, 0
      %p140 = por %p138, %p139
      %s141 = ssub.s32 %s20, %s32
      %s142 = ssub.s32 %s21, %s28
      %s143 = sor.u32 %s141, %s142
      %p144 = scmp.eq.s32.totalorder %s143, 0
      %s146 = sadd.s32 %s145, 1
      %s147 = scalar_select %p144, %s145, %s146
      %p150 = pneg %p144
      %p151 = scmp.eq.s32.totalorder %s13, 3
      %p152 = por %p150, %p151
      %p153 = scmp.ne.s32.totalorder %s145, %s148
      %p154 = scmp.eq.s32.totalorder %s13, 0
      %p155 = por %p153, %p154
      %p156 = scmp.ne.s32.totalorder %s145, %s148
      %p157 = scmp.eq.s32.totalorder %s18, 3
      %p158 = por %p156, %p157
      %p159 = scmp.ne.s32.totalorder %s148, %s149
      %p160 = scmp.eq.s32.totalorder %s18, 0
      %p161 = por %p159, %p160
      %p162 = scmp.ne.s32.totalorder %s148, %s149
      %p163 = scmp.eq.s32.totalorder %s19, 3
      %p164 = por %p162, %p163
      %p166 = scmp.ne.s32.totalorder %s149, %s165
      %p167 = scmp.eq.s32.totalorder %s19, 0
      %p168 = por %p166, %p167
      %p169 = scmp.le.s32.totalorder 1, %s13
      %p170 = scmp.lt.s32.totalorder %s13, 5
      %p171 = pnand %p169, %p170
      %p172 = pneg %p171
      // Predicated region
      $region9: #{_pitch_shift_core.5} parent=5 // pred_check
        _
      $region10: #{_pitch_shift_core.5} parent=5 // pred_check_branch
        %174 = sbr.rel (%p171) target = $region12
      $region11: #{_pitch_shift_core.5} parent=5 // pred_region
        %s175 = ssub.s32 %s13, 1
      $region12: #{_pitch_shift_core.5} parent=5 // pred_fallthru
        _
      %p176 = scmp.lt.s32.totalorder %s13, 4
      // Predicated region
      $region13: #{_pitch_shift_core.5} parent=5 // pred_check
        %p177 = pneg %p176
      $region14: #{_pitch_shift_core.5} parent=5 // pred_check_branch
        %179 = sbr.rel (%p177) target = $region16
      $region15: #{_pitch_shift_core.5} parent=5 // pred_region
        // Predicated region
        $region17: #{_pitch_shift_core.5} parent=15 // pred_check
          %p180 = pneg %p47
        $region18: #{_pitch_shift_core.5} parent=15 // pred_check_branch
          %182 = sbr.rel (%p180) target = $region20
        $region19: #{_pitch_shift_core.5} parent=15 // pred_region
          %s183 = smul.u32 2, %s21
          %p184 = scmp.lt.s32.totalorder %s20, 0
          %s185 = scalar_select %p184, %s20, 0
          %p186 = scmp.lt.s32.totalorder %s183, 7
          %s187 = scalar_select %p186, %s183, 7
          %s188 = smul.addr %s185, 8
          %s189 = sadd.s32 %s187, %s188
          %s190 = smul.addr %s189, 2
          %s191 = scalar_lea.vmem %s0, %s190
          %s192 = smul.u32 2, %s21
        $region20: #{_pitch_shift_core.5} parent=15 // pred_fallthru
          _
        // Predicated region
        $region21: #{_pitch_shift_core.5} parent=15 // pred_check
          %p193 = pneg %p75
        $region22: #{_pitch_shift_core.5} parent=15 // pred_check_branch
          %195 = sbr.rel (%p193) target = $region24
        $region23: #{_pitch_shift_core.5} parent=15 // pred_region
          %s196 = smul.u32 2, %s21
          %p197 = scmp.lt.s32.totalorder %s20, 0
          %s198 = scalar_select %p197, %s20, 0
          %p199 = scmp.lt.s32.totalorder %s196, 7
          %s200 = scalar_select %p199, %s196, 7
          %s201 = smul.addr %s198, 8
          %s202 = sadd.s32 %s200, %s201
          %s203 = smul.addr %s202, 2
          %s204 = scalar_lea.vmem %s1, %s203
          %s205 = smul.u32 2, %s21
        $region24: #{_pitch_shift_core.5} parent=15 // pred_fallthru
          _
        // Predicated region
        $region25: #{_pitch_shift_core.5} parent=15 // pred_check
          %p206 = pneg %p101
        $region26: #{_pitch_shift_core.5} parent=15 // pred_check_branch
          %208 = sbr.rel (%p206) target = $region28
        $region27: #{_pitch_shift_core.5} parent=15 // pred_region
          %s209 = smul.u32 2, %s21
          %p210 = scmp.lt.s32.totalorder %s209, 7
          %s211 = scalar_select %p210, %s209, 7
          %s212 = scalar_lea.vmem %s2, %s211
          %s213 = smul.u32 2, %s21
        $region28: #{_pitch_shift_core.5} parent=15 // pred_fallthru
          _
        // Predicated region
        $region29: #{_pitch_shift_core.5} parent=15 // pred_check
          %p214 = pneg %p127
        $region30: #{_pitch_shift_core.5} parent=15 // pred_check_branch
          %216 = sbr.rel (%p214) target = $region32
        $region31: #{_pitch_shift_core.5} parent=15 // pred_region
          %s217 = smul.u32 2, %s21
          %p218 = scmp.lt.s32.totalorder %s217, 7
          %s219 = scalar_select %p218, %s217, 7
          %s220 = scalar_lea.vmem %s3, %s219
          %s221 = smul.u32 2, %s21
        $region32: #{_pitch_shift_core.5} parent=15 // pred_fallthru
          _
      $region16: #{_pitch_shift_core.5} parent=5 // pred_fallthru
        _
      %p222 = scmp.le.s32.totalorder 1, %s13
      %p223 = scmp.lt.s32.totalorder %s13, 5
      %p224 = pnand %p222, %p223
      %p225 = pneg %p224
      // Predicated region
      $region33: #{_pitch_shift_core.5} parent=5 // pred_check
        _
      $region34: #{_pitch_shift_core.5} parent=5 // pred_check_branch
        %227 = sbr.rel (%p224) target = $region36
      $region35: #{_pitch_shift_core.5} parent=5 // pred_region
        %s228 = ssub.s32 %s13, 1
        %s229 = smul.u32 2, %s23
        %p230 = scmp.lt.s32.totalorder %s22, 0
        %s231 = scalar_select %p230, %s22, 0
        %p232 = scmp.lt.s32.totalorder %s229, 7
        %s233 = scalar_select %p232, %s229, 7
        %s234 = smul.addr %s231, 8
        %s235 = sadd.s32 %s233, %s234
        %s236 = smul.addr %s235, 2
        %s237 = scalar_lea.vmem %s0, %s236
        %p238 = pneg %p53
        %p239 = pneg %p50
        %s240 = smul.u32 2, %s23
        %p241 = scmp.lt.s32.totalorder %s22, 0
        %s242 = scalar_select %p241, %s22, 0
        %p243 = scmp.lt.s32.totalorder %s240, 7
        %s244 = scalar_select %p243, %s240, 7
        %s245 = smul.addr %s242, 8
        %s246 = sadd.s32 %s244, %s245
        %s247 = smul.addr %s246, 2
        %s248 = scalar_lea.vmem %s1, %s247
        %p249 = pneg %p81
        %p250 = pneg %p78
        %s251 = smul.u32 2, %s23
        %p252 = scmp.lt.s32.totalorder %s251, 7
        %s253 = scalar_select %p252, %s251, 7
        %s254 = scalar_lea.vmem %s2, %s253
        %p255 = pneg %p107
        %p256 = pneg %p104
        %s257 = smul.u32 2, %s23
        %p258 = scmp.lt.s32.totalorder %s257, 7
        %s259 = scalar_select %p258, %s257, 7
        %s260 = scalar_lea.vmem %s3, %s259
        %p261 = pneg %p133
        %p262 = pneg %p130
        %p263 = pneg %p161
        %p264 = pneg %p158
        %s265 = sand.u32 %s148, 1
        %s266 = scalar_lea.sflag [#allocation3], %s265
        %s267 = sand.u32 %s148, 1
        %s268 = smul.addr %s267, 4
        %s269 = scalar_lea.vmem [#allocation2], %s268
        %s270 = smul.u32 2, %s23
        %p271 = scmp.lt.s32.totalorder %s22, 0
        %s272 = scalar_select %p271, %s22, 0
        %p273 = scmp.lt.s32.totalorder %s270, 7
        %s274 = scalar_select %p273, %s270, 7
        %s275 = smul.addr %s272, 8
        %s276 = sadd.s32 %s274, %s275
        %s277 = smul.addr %s276, 2
        %s278 = scalar_lea.vmem %s0, %s277
        %s279 = smul.u32 2, %s23
        %s280 = smul.u32 2, %s23
        %p281 = scmp.lt.s32.totalorder %s22, 0
        %s282 = scalar_select %p281, %s22, 0
        %p283 = scmp.lt.s32.totalorder %s280, 7
        %s284 = scalar_select %p283, %s280, 7
        %s285 = smul.addr %s282, 8
        %s286 = sadd.s32 %s284, %s285
        %s287 = smul.addr %s286, 2
        %s288 = scalar_lea.vmem %s1, %s287
        %s289 = smul.u32 2, %s23
        %s290 = smul.u32 2, %s23
        %p291 = scmp.lt.s32.totalorder %s290, 7
        %s292 = scalar_select %p291, %s290, 7
        %s293 = scalar_lea.vmem %s2, %s292
        %s294 = smul.u32 2, %s23
        %s295 = smul.u32 2, %s23
        %p296 = scmp.lt.s32.totalorder %s295, 7
        %s297 = scalar_select %p296, %s295, 7
        %s298 = scalar_lea.vmem %s3, %s297
        %s299 = smul.u32 2, %s23
        %s300 = smul.u32 2, %s23
        %v301 = vld [vmem:[%s293] sm:$0x3]
        %v302 = vld [vmem:[%s278] sm:$0xf]
        %v304 = vlaneseq
        %v305 = vshrl.u32 %v304, 7
        %v306 = vsub.s32 0, %v305
        %v307 = vrot.slane %v301, %v306
        %v308 = vlaneseq
        %v309 = vshrl.u32 %v308, 7
        %v310 = vsub.s32 1, %v309
        %v311 = vrot.slane %v301, %v310
        %v316 = vunpack.c.l.s4 1983009808
        %v317 = vunpack.c.0.s8 %v316
        %v318 = vlaneseq
        %v319 = vshrl.u32 %v318, 7
        %v320 = vsub.s32 %v317, %v319
        %v321 = vrot.slane %v302, %v320
        %v322 = vcombine.high %v321, %v321
        %v325 = vmul.f32 %v307, %v321
        %v326 = vmul.f32 %v311, %v322
        %v327 = vld [vmem:[%s298] sm:$0x3]
        %v328 = vld [vmem:[%s288] sm:$0xf]
        %v330 = vlaneseq
        %v331 = vshrl.u32 %v330, 7
        %v332 = vsub.s32 0, %v331
        %v333 = vrot.slane %v327, %v332
        %v334 = vlaneseq
        %v335 = vshrl.u32 %v334, 7
        %v336 = vsub.s32 1, %v335
        %v337 = vrot.slane %v327, %v336
        %v342 = vunpack.c.l.s4 1983009808
        %v343 = vunpack.c.0.s8 %v342
        %v344 = vlaneseq
        %v345 = vshrl.u32 %v344, 7
        %v346 = vsub.s32 %v343, %v345
        %v347 = vrot.slane %v328, %v346
        %v348 = vcombine.high %v347, %v347
        %v351 = vmul.f32 %v333, %v347
        %v352 = vmul.f32 %v337, %v348
        %v353 = vadd.f32 %v325, %v351
        %v354 = vadd.f32 %v326, %v352
        %v357 = vcombine.low %v353, %v354
        %v359 = vunpack.c.l.s4 1983009808
        %v360 = vunpack.c.0.s8 %v359
        %v361 = vlaneseq
        %v362 = vshrl.u32 %v361, 7
        %v363 = vsub.s32 %v360, %v362
        %v364 = vrot.slane %v357, %v363
        %366 = vst [vmem:[%s269] sm:$0xf] %v364
        %s367 = sand.u32 %s148, 1
        %s368 = scalar_lea.sflag [#allocation3], %s367
        %s369 = sand.u32 %s148, 1
        %s370 = smul.addr %s369, 4
        %s371 = scalar_lea.vmem [#allocation2], %s370
        // Predicated region
        $region37: #{_pitch_shift_core.5} parent=35 // pred_check
          %p372 = pneg %p158
        $region38: #{_pitch_shift_core.5} parent=35 // pred_check_branch
          %374 = sbr.rel (%p372) target = $region40
        $region39: #{_pitch_shift_core.5} parent=35 // pred_region
          %s375 = smul.u32 2, %s23
          %s377 = ssub.s32 64, 64
          %378 = vsyncadd %s368, %s377
          %s379 = smul.addr %s22, 8
          %s380 = sadd.s32 %s375, %s379
          %s381 = smul.addr %s380, 32
          %s382 = scalar_lea.hbm %s4, %s381
          %s384 = sshll.u32 %s371, 4
          %s385 = int_to_ptr.vmem [resolvable:$true] %s384
          %387 = dma.vmem_to_hbm [thread:$0]  %s385, 64, %s382, %s368
        $region40: #{_pitch_shift_core.5} parent=35 // pred_fallthru
          _
      $region36: #{_pitch_shift_core.5} parent=5 // pred_fallthru
        _
      %p388 = scmp.le.s32.totalorder 2, %s13
      // Predicated region
      $region41: #{_pitch_shift_core.5} parent=5 // pred_check
        %p389 = pneg %p388
      $region42: #{_pitch_shift_core.5} parent=5 // pred_check_branch
        %391 = sbr.rel (%p389) target = $region44
      $region43: #{_pitch_shift_core.5} parent=5 // pred_region
        %s392 = ssub.s32 %s13, 2
        // Predicated region
        $region45: #{_pitch_shift_core.5} parent=43 // pred_check
          %p393 = pneg %p164
        $region46: #{_pitch_shift_core.5} parent=43 // pred_check_branch
          %395 = sbr.rel (%p393) target = $region48
        $region47: #{_pitch_shift_core.5} parent=43 // pred_region
          %s396 = sand.u32 %s149, 1
          %s397 = scalar_lea.sflag [#allocation3], %s396
          %s398 = sand.u32 %s149, 1
          %s399 = smul.addr %s398, 4
          %s400 = scalar_lea.vmem [#allocation2], %s399
          %401 = dma.done %s397, 64
        $region48: #{_pitch_shift_core.5} parent=43 // pred_fallthru
          _
      $region44: #{_pitch_shift_core.5} parent=5 // pred_fallthru
        _
    $region6: #{_pitch_shift_core.5} parent=1 // loop_footer
      %s17 = sadd.s32 1, %s13
    $region7: #{_pitch_shift_core.5} parent=1 // loop_footer_branch
      %12 = sbr.rel target = $region3
    $region8: #{_pitch_shift_core.5} parent=1 // loop_exit
      _
    %402 = vsyncpa [#allocation3], 1
    %s403 = scalar_lea.sflag [#allocation3], 1
    %404 = vsyncpa %s403, 1

</llo_original>
